<compile_context>
chip_gen: v7x
topology: tpu7x:2x2x1
jax: 0.10.0
libtpu: 0.0.40
codegen_flags: <defaults>
</compile_context>

<pallas_src>
import jax
import jax.numpy as jnp
import numpy as np
from jax import lax
from jax.experimental import pallas as pl
from jax.experimental.pallas import tpu as pltpu


def kf_kernel(packed_ref, out_ref):
    n = out_ref.shape[0] // 3
    zero = jnp.float32(0.0)
    one = jnp.float32(1.0)

    # state[0] = zeros (first output row, never touched by the loop)
    out_ref[0] = zero
    out_ref[1] = zero
    out_ref[2] = zero

    # R (symmetric), hoisted out of the loop: [r00, r11, r22, r01, r02, r12]
    r00 = packed_ref[0]
    r11 = packed_ref[1]
    r22 = packed_ref[2]
    r01 = packed_ref[3]
    r02 = packed_ref[4]
    r12 = packed_ref[5]

    def step(i, carry):
        (s0, s1, s2, p00, p01, p02, p11, p12, p22) = carry
        base = 6 + 13 * i

        # ---- carry-independent loads / math (hoistable across iterations) --
        dt = packed_ref[base + 0]
        dt2 = dt * dt
        prx0 = s0 + packed_ref[base + 1] * dt2
        prx1 = s1 + packed_ref[base + 2] * dt2
        prx2 = s2 + packed_ref[base + 3] * dt2
        ms0 = packed_ref[base + 4]
        ms1 = packed_ref[base + 5]
        ms2 = packed_ref[base + 6]
        m00 = packed_ref[base + 7]
        m01 = packed_ref[base + 8]
        m02 = packed_ref[base + 9]
        m11 = packed_ref[base + 10]
        m12 = packed_ref[base + 11]
        m22 = packed_ref[base + 12]

        # prCov = sysCov[i-1] + R   (symmetric -> 6 unique entries)
        q00 = p00 + r00; q01 = p01 + r01; q02 = p02 + r02
        q11 = p11 + r11; q12 = p12 + r12; q22 = p22 + r22

        # A = prCov + mCov[i]       (symmetric)
        a00 = q00 + m00; a01 = q01 + m01; a02 = q02 + m02
        a11 = q11 + m11; a12 = q12 + m12; a22 = q22 + m22

        # Symmetric 3x3 adjugate + determinant (closed-form torch.inverse)
        v00 = a11 * a22 - a12 * a12
        v01 = a02 * a12 - a01 * a22
        v02 = a01 * a12 - a02 * a11
        v11 = a00 * a22 - a02 * a02
        v12 = a01 * a02 - a00 * a12
        v22 = a00 * a11 - a01 * a01
        det = a00 * v00 + a01 * v01 + a02 * v02
        idet = one / det  # divide latency hides under the K_raw matmul below

        # K_raw = prCov @ adj(A)  (un-normalised gain, independent of idet)
        k00 = q00 * v00 + q01 * v01 + q02 * v02
        k01 = q00 * v01 + q01 * v11 + q02 * v12
        k02 = q00 * v02 + q01 * v12 + q02 * v22
        k10 = q01 * v00 + q11 * v01 + q12 * v02
        k11 = q01 * v01 + q11 * v11 + q12 * v12
        k12 = q01 * v02 + q11 * v12 + q12 * v22
        k20 = q02 * v00 + q12 * v01 + q22 * v02
        k21 = q02 * v01 + q12 * v11 + q22 * v12
        k22 = q02 * v02 + q12 * v12 + q22 * v22

        # innov = mSig[i] - prX ; corrX = prX + (K_raw @ innov) * idet
        n0 = ms0 - prx0
        n1 = ms1 - prx1
        n2 = ms2 - prx2
        cx0 = prx0 + (k00 * n0 + k01 * n1 + k02 * n2) * idet
        cx1 = prx1 + (k10 * n0 + k11 * n1 + k12 * n2) * idet
        cx2 = prx2 + (k20 * n0 + k21 * n1 + k22 * n2) * idet

        # corrCov = prCov - (K_raw @ prCov) * idet  (symmetric -> 6 entries)
        c00 = q00 - (k00 * q00 + k01 * q01 + k02 * q02) * idet
        c01 = q01 - (k00 * q01 + k01 * q11 + k02 * q12) * idet
        c02 = q02 - (k00 * q02 + k01 * q12 + k02 * q22) * idet
        c11 = q11 - (k10 * q01 + k11 * q11 + k12 * q12) * idet
        c12 = q12 - (k10 * q02 + k11 * q12 + k12 * q22) * idet
        c22 = q22 - (k20 * q02 + k21 * q12 + k22 * q22) * idet

        # state[i] = corrX
        out_ref[3 * i + 0] = cx0
        out_ref[3 * i + 1] = cx1
        out_ref[3 * i + 2] = cx2

        return (cx0, cx1, cx2, c00, c01, c02, c11, c12, c22)

    init = (zero,) * 9
    # Full unroll for small N (gives LLO full scheduling visibility); modest
    # unroll factor for large N to bound code size.
    unroll = True if n <= 64 else 4
    lax.fori_loop(1, n, step, init, unroll=unroll)


class KFBlockPallas:
    """JAX/Pallas equivalent of TorchKFBLock."""

    def __init__(self, gt, dt, prSig, mSig, mCov):
        self.gt = jnp.asarray(gt, jnp.float32)        # stored but unused (as in reference)
        dt = jnp.asarray(dt, jnp.float32)             # (N,)
        prSig = jnp.asarray(prSig, jnp.float32)       # (N,3)
        mSig = jnp.asarray(mSig, jnp.float32)         # (N,3)
        mCov = jnp.asarray(mCov, jnp.float32)         # (N,3,3)

        self.N = int(prSig.shape[0])

        # Measurement covariance is symmetric by definition; symmetrize and
        # keep only the 6 unique entries [m00, m01, m02, m11, m12, m22].
        msym = 0.5 * (mCov + jnp.swapaxes(mCov, -1, -2))
        mcov6 = jnp.stack(
            [msym[:, 0, 0], msym[:, 0, 1], msym[:, 0, 2],
             msym[:, 1, 1], msym[:, 1, 2], msym[:, 2, 2]],
            axis=1,
        )

        # Time-interleaved per-step block of 13 scalars (flat 1D, SMEM-friendly):
        # [dt, prSig(3), mSig(3), mCov_upper(6)]
        self._data = jnp.concatenate(
            [dt[:, None], prSig, mSig, mcov6], axis=1
        ).reshape(-1).astype(jnp.float32)             # (13*N,)

    def __call__(self, guess, sign):
        guess = jnp.asarray(guess, jnp.float32)       # (1,6)
        sign = jnp.asarray(sign, jnp.float32)         # (1,3)
        N = self.N

        # Parameter setup (plain JAX glue; 10**x off the sequential hot path).
        # Symmetric R packed as [R00, R11, R22, R10, R20, R21].
        diag = jnp.power(jnp.float32(10.0), guess[0, 0:3])
        off = sign[0, 0:3] * jnp.power(jnp.float32(10.0), guess[0, 3:6])
        rvals = jnp.concatenate([diag, off]).astype(jnp.float32)

        packed = jnp.concatenate([rvals, self._data])  # (6 + 13*N,)

        out_flat = pl.pallas_call(
            kf_kernel,
            out_shape=jax.ShapeDtypeStruct((3 * N,), jnp.float32),
            in_specs=[pl.BlockSpec(memory_space=pltpu.MemorySpace.SMEM)],
            out_specs=pl.BlockSpec(memory_space=pltpu.MemorySpace.SMEM),
        )(packed)
        return out_flat.reshape(N, 3)


def kf_reference_numpy(dt, prSig, mSig, mCov, guess, sign):
    """float64 numpy mirror of the PyTorch forward (ground truth)."""
    dt = np.asarray(dt, np.float64)
    prSig = np.asarray(prSig, np.float64)
    mSig = np.asarray(mSig, np.float64)
    mCov = np.asarray(mCov, np.float64)
    guess = np.asarray(guess, np.float64)
    sign = np.asarray(sign, np.float64)

    R = np.ones((3, 3))
    R[0, 0] *= 10 ** guess[0, 0]
    R[1, 1] *= 10 ** guess[0, 1]
    R[2, 2] *= 10 ** guess[0, 2]
    R[1, 0] *= sign[0, 0] * 10 ** guess[0, 3]
    R[2, 0] *= sign[0, 1] * 10 ** guess[0, 4]
    R[2, 1] *= sign[0, 2] * 10 ** guess[0, 5]
    R[0, 1] = R[1, 0]
    R[0, 2] = R[2, 0]
    R[1, 2] = R[2, 1]

    N = prSig.shape[0]
    state = np.zeros((N, 3))
    sysCov = np.zeros((N, 3, 3))
    for i in range(1, N):
        prX = state[i - 1, :] + prSig[i] * dt[i] ** 2
        prCov = sysCov[i - 1, :] + R
        K = np.linalg.inv(prCov + mCov[i])
        K = prCov @ K
        innov = mSig[i] - prX
        corrX = prX + K @ innov
        corrCov = prCov - K @ prCov
        state[i] = corrX
        sysCov[i] = corrCov
    return state


if __name__ == "__main__":
    key = jax.random.PRNGKey(0)
    k0, k1, k2, k3, k4, k5, k6 = jax.random.split(key, 7)

    N = 8  # sequence length implied by prSig.shape[0]

    dt = 0.1 + 0.05 * jax.random.uniform(k0, (N,), dtype=jnp.float32)
    prSig = 0.5 * jax.random.normal(k1, (N, 3), dtype=jnp.float32)
    mSig = 0.5 * jax.random.normal(k2, (N, 3), dtype=jnp.float32)
    B = 0.2 * jax.random.normal(k3, (N, 3, 3), dtype=jnp.float32)
    mCov = jnp.eye(3, dtype=jnp.float32)[None, :, :] + jnp.einsum("nij,nkj->nik", B, B)
    gt = jax.random.normal(k4, (N, 3), dtype=jnp.float32)  # unused in forward

    guess = 0.3 * jax.random.normal(k5, (1, 6), dtype=jnp.float32)
    sign = jnp.sign(jax.random.normal(k6, (1, 3), dtype=jnp.float32))
    sign = jnp.where(sign == 0, jnp.float32(1.0), sign)

    model = KFBlockPallas(gt, dt, prSig, mSig, mCov)
    state = model(guess, sign)
    state = jax.block_until_ready(state)

    ref = kf_reference_numpy(dt, prSig, mSig, mCov, guess, sign)
    np.testing.assert_allclose(np.asarray(state), ref, rtol=2e-3, atol=1e-4)

    print("KERNEL_OK")
</pallas_src>

<mosaic_0001>
module attributes {stable_mosaic.version = 11 : i64} {
  func.func @kf_kernel(%arg0: memref<110xf32, #tpu.memory_space<smem>>, %arg1: memref<24xf32, #tpu.memory_space<smem>>) attributes {dimension_semantics = [], scalar_prefetch = 0 : i64, scratch_operands = 0 : i64, tpu.core_type = #tpu.core_type<tc>} {
    %cst = arith.constant 0.000000e+00 : f32
    %c0 = arith.constant 0 : index
    %0 = memref.load %arg1[%c0] : memref<24xf32, #tpu.memory_space<smem>>
    memref.store %cst, %arg1[%c0] : memref<24xf32, #tpu.memory_space<smem>>
    %cst_0 = arith.constant 0.000000e+00 : f32
    %c1 = arith.constant 1 : index
    %1 = memref.load %arg1[%c1] : memref<24xf32, #tpu.memory_space<smem>>
    memref.store %cst_0, %arg1[%c1] : memref<24xf32, #tpu.memory_space<smem>>
    %cst_1 = arith.constant 0.000000e+00 : f32
    %c2 = arith.constant 2 : index
    %2 = memref.load %arg1[%c2] : memref<24xf32, #tpu.memory_space<smem>>
    memref.store %cst_1, %arg1[%c2] : memref<24xf32, #tpu.memory_space<smem>>
    %c0_2 = arith.constant 0 : index
    %3 = memref.load %arg0[%c0_2] : memref<110xf32, #tpu.memory_space<smem>>
    %c1_3 = arith.constant 1 : index
    %4 = memref.load %arg0[%c1_3] : memref<110xf32, #tpu.memory_space<smem>>
    %c2_4 = arith.constant 2 : index
    %5 = memref.load %arg0[%c2_4] : memref<110xf32, #tpu.memory_space<smem>>
    %c3 = arith.constant 3 : index
    %6 = memref.load %arg0[%c3] : memref<110xf32, #tpu.memory_space<smem>>
    %c4 = arith.constant 4 : index
    %7 = memref.load %arg0[%c4] : memref<110xf32, #tpu.memory_space<smem>>
    %c5 = arith.constant 5 : index
    %8 = memref.load %arg0[%c5] : memref<110xf32, #tpu.memory_space<smem>>
    %cst_5 = arith.constant 1.000000e+00 : f32
    %cst_6 = arith.constant 0.000000e+00 : f32
    %cst_7 = arith.constant 0.000000e+00 : f32
    %cst_8 = arith.constant 0.000000e+00 : f32
    %cst_9 = arith.constant 0.000000e+00 : f32
    %cst_10 = arith.constant 0.000000e+00 : f32
    %cst_11 = arith.constant 0.000000e+00 : f32
    %cst_12 = arith.constant 0.000000e+00 : f32
    %cst_13 = arith.constant 0.000000e+00 : f32
    %cst_14 = arith.constant 0.000000e+00 : f32
    %c1_i32 = arith.constant 1 : i32
    %c13_i32 = arith.constant 13 : i32
    %9 = arith.muli %c13_i32, %c1_i32 : i32
    %c6_i32 = arith.constant 6 : i32
    %10 = arith.addi %c6_i32, %9 : i32
    %c0_i32 = arith.constant 0 : i32
    %11 = arith.addi %10, %c0_i32 : i32
    %12 = arith.index_cast %11 : i32 to index
    %13 = memref.load %arg0[%12] : memref<110xf32, #tpu.memory_space<smem>>
    %14 = arith.mulf %13, %13 : f32
    %c1_i32_15 = arith.constant 1 : i32
    %15 = arith.addi %10, %c1_i32_15 : i32
    %16 = arith.index_cast %15 : i32 to index
    %17 = memref.load %arg0[%16] : memref<110xf32, #tpu.memory_space<smem>>
    %18 = arith.mulf %17, %14 : f32
    %19 = arith.addf %cst_6, %18 : f32
    %c2_i32 = arith.constant 2 : i32
    %20 = arith.addi %10, %c2_i32 : i32
    %21 = arith.index_cast %20 : i32 to index
    %22 = memref.load %arg0[%21] : memref<110xf32, #tpu.memory_space<smem>>
    %23 = arith.mulf %22, %14 : f32
    %24 = arith.addf %cst_7, %23 : f32
    %c3_i32 = arith.constant 3 : i32
    %25 = arith.addi %10, %c3_i32 : i32
    %26 = arith.index_cast %25 : i32 to index
    %27 = memref.load %arg0[%26] : memref<110xf32, #tpu.memory_space<smem>>
    %28 = arith.mulf %27, %14 : f32
    %29 = arith.addf %cst_8, %28 : f32
    %c4_i32 = arith.constant 4 : i32
    %30 = arith.addi %10, %c4_i32 : i32
    %31 = arith.index_cast %30 : i32 to index
    %32 = memref.load %arg0[%31] : memref<110xf32, #tpu.memory_space<smem>>
    %c5_i32 = arith.constant 5 : i32
    %33 = arith.addi %10, %c5_i32 : i32
    %34 = arith.index_cast %33 : i32 to index
    %35 = memref.load %arg0[%34] : memref<110xf32, #tpu.memory_space<smem>>
    %c6_i32_16 = arith.constant 6 : i32
    %36 = arith.addi %10, %c6_i32_16 : i32
    %37 = arith.index_cast %36 : i32 to index
    %38 = memref.load %arg0[%37] : memref<110xf32, #tpu.memory_space<smem>>
    %c7_i32 = arith.constant 7 : i32
    %39 = arith.addi %10, %c7_i32 : i32
    %40 = arith.index_cast %39 : i32 to index
    %41 = memref.load %arg0[%40] : memref<110xf32, #tpu.memory_space<smem>>
    %c8_i32 = arith.constant 8 : i32
    %42 = arith.addi %10, %c8_i32 : i32
    %43 = arith.index_cast %42 : i32 to index
    %44 = memref.load %arg0[%43] : memref<110xf32, #tpu.memory_space<smem>>
    %c9_i32 = arith.constant 9 : i32
    %45 = arith.addi %10, %c9_i32 : i32
    %46 = arith.index_cast %45 : i32 to index
    %47 = memref.load %arg0[%46] : memref<110xf32, #tpu.memory_space<smem>>
    %c10_i32 = arith.constant 10 : i32
    %48 = arith.addi %10, %c10_i32 : i32
    %49 = arith.index_cast %48 : i32 to index
    %50 = memref.load %arg0[%49] : memref<110xf32, #tpu.memory_space<smem>>
    %c11_i32 = arith.constant 11 : i32
    %51 = arith.addi %10, %c11_i32 : i32
    %52 = arith.index_cast %51 : i32 to index
    %53 = memref.load %arg0[%52] : memref<110xf32, #tpu.memory_space<smem>>
    %c12_i32 = arith.constant 12 : i32
    %54 = arith.addi %10, %c12_i32 : i32
    %55 = arith.index_cast %54 : i32 to index
    %56 = memref.load %arg0[%55] : memref<110xf32, #tpu.memory_space<smem>>
    %57 = arith.addf %cst_9, %3 : f32
    %58 = arith.addf %cst_10, %6 : f32
    %59 = arith.addf %cst_11, %7 : f32
    %60 = arith.addf %cst_12, %4 : f32
    %61 = arith.addf %cst_13, %8 : f32
    %62 = arith.addf %cst_14, %5 : f32
    %63 = arith.addf %57, %41 : f32
    %64 = arith.addf %58, %44 : f32
    %65 = arith.addf %59, %47 : f32
    %66 = arith.addf %60, %50 : f32
    %67 = arith.addf %61, %53 : f32
    %68 = arith.addf %62, %56 : f32
    %69 = arith.mulf %66, %68 : f32
    %70 = arith.mulf %67, %67 : f32
    %71 = arith.subf %69, %70 : f32
    %72 = arith.mulf %65, %67 : f32
    %73 = arith.mulf %64, %68 : f32
    %74 = arith.subf %72, %73 : f32
    %75 = arith.mulf %64, %67 : f32
    %76 = arith.mulf %65, %66 : f32
    %77 = arith.subf %75, %76 : f32
    %78 = arith.mulf %63, %68 : f32
    %79 = arith.mulf %65, %65 : f32
    %80 = arith.subf %78, %79 : f32
    %81 = arith.mulf %64, %65 : f32
    %82 = arith.mulf %63, %67 : f32
    %83 = arith.subf %81, %82 : f32
    %84 = arith.mulf %63, %66 : f32
    %85 = arith.mulf %64, %64 : f32
    %86 = arith.subf %84, %85 : f32
    %87 = arith.mulf %63, %71 : f32
    %88 = arith.mulf %64, %74 : f32
    %89 = arith.addf %87, %88 : f32
    %90 = arith.mulf %65, %77 : f32
    %91 = arith.addf %89, %90 : f32
    %92 = arith.divf %cst_5, %91 : f32
    %93 = arith.mulf %57, %71 : f32
    %94 = arith.mulf %58, %74 : f32
    %95 = arith.addf %93, %94 : f32
    %96 = arith.mulf %59, %77 : f32
    %97 = arith.addf %95, %96 : f32
    %98 = arith.mulf %57, %74 : f32
    %99 = arith.mulf %58, %80 : f32
    %100 = arith.addf %98, %99 : f32
    %101 = arith.mulf %59, %83 : f32
    %102 = arith.addf %100, %101 : f32
    %103 = arith.mulf %57, %77 : f32
    %104 = arith.mulf %58, %83 : f32
    %105 = arith.addf %103, %104 : f32
    %106 = arith.mulf %59, %86 : f32
    %107 = arith.addf %105, %106 : f32
    %108 = arith.mulf %58, %71 : f32
    %109 = arith.mulf %60, %74 : f32
    %110 = arith.addf %108, %109 : f32
    %111 = arith.mulf %61, %77 : f32
    %112 = arith.addf %110, %111 : f32
    %113 = arith.mulf %58, %74 : f32
    %114 = arith.mulf %60, %80 : f32
    %115 = arith.addf %113, %114 : f32
    %116 = arith.mulf %61, %83 : f32
    %117 = arith.addf %115, %116 : f32
    %118 = arith.mulf %58, %77 : f32
    %119 = arith.mulf %60, %83 : f32
    %120 = arith.addf %118, %119 : f32
    %121 = arith.mulf %61, %86 : f32
    %122 = arith.addf %120, %121 : f32
    %123 = arith.mulf %59, %71 : f32
    %124 = arith.mulf %61, %74 : f32
    %125 = arith.addf %123, %124 : f32
    %126 = arith.mulf %62, %77 : f32
    %127 = arith.addf %125, %126 : f32
    %128 = arith.mulf %59, %74 : f32
    %129 = arith.mulf %61, %80 : f32
    %130 = arith.addf %128, %129 : f32
    %131 = arith.mulf %62, %83 : f32
    %132 = arith.addf %130, %131 : f32
    %133 = arith.mulf %59, %77 : f32
    %134 = arith.mulf %61, %83 : f32
    %135 = arith.addf %133, %134 : f32
    %136 = arith.mulf %62, %86 : f32
    %137 = arith.addf %135, %136 : f32
    %138 = arith.subf %32, %19 : f32
    %139 = arith.subf %35, %24 : f32
    %140 = arith.subf %38, %29 : f32
    %141 = arith.mulf %97, %138 : f32
    %142 = arith.mulf %102, %139 : f32
    %143 = arith.addf %141, %142 : f32
    %144 = arith.mulf %107, %140 : f32
    %145 = arith.addf %143, %144 : f32
    %146 = arith.mulf %145, %92 : f32
    %147 = arith.addf %19, %146 : f32
    %148 = arith.mulf %112, %138 : f32
    %149 = arith.mulf %117, %139 : f32
    %150 = arith.addf %148, %149 : f32
    %151 = arith.mulf %122, %140 : f32
    %152 = arith.addf %150, %151 : f32
    %153 = arith.mulf %152, %92 : f32
    %154 = arith.addf %24, %153 : f32
    %155 = arith.mulf %127, %138 : f32
    %156 = arith.mulf %132, %139 : f32
    %157 = arith.addf %155, %156 : f32
    %158 = arith.mulf %137, %140 : f32
    %159 = arith.addf %157, %158 : f32
    %160 = arith.mulf %159, %92 : f32
    %161 = arith.addf %29, %160 : f32
    %162 = arith.mulf %97, %57 : f32
    %163 = arith.mulf %102, %58 : f32
    %164 = arith.addf %162, %163 : f32
    %165 = arith.mulf %107, %59 : f32
    %166 = arith.addf %164, %165 : f32
    %167 = arith.mulf %166, %92 : f32
    %168 = arith.subf %57, %167 : f32
    %169 = arith.mulf %97, %58 : f32
    %170 = arith.mulf %102, %60 : f32
    %171 = arith.addf %169, %170 : f32
    %172 = arith.mulf %107, %61 : f32
    %173 = arith.addf %171, %172 : f32
    %174 = arith.mulf %173, %92 : f32
    %175 = arith.subf %58, %174 : f32
    %176 = arith.mulf %97, %59 : f32
    %177 = arith.mulf %102, %61 : f32
    %178 = arith.addf %176, %177 : f32
    %179 = arith.mulf %107, %62 : f32
    %180 = arith.addf %178, %179 : f32
    %181 = arith.mulf %180, %92 : f32
    %182 = arith.subf %59, %181 : f32
    %183 = arith.mulf %112, %58 : f32
    %184 = arith.mulf %117, %60 : f32
    %185 = arith.addf %183, %184 : f32
    %186 = arith.mulf %122, %61 : f32
    %187 = arith.addf %185, %186 : f32
    %188 = arith.mulf %187, %92 : f32
    %189 = arith.subf %60, %188 : f32
    %190 = arith.mulf %112, %59 : f32
    %191 = arith.mulf %117, %61 : f32
    %192 = arith.addf %190, %191 : f32
    %193 = arith.mulf %122, %62 : f32
    %194 = arith.addf %192, %193 : f32
    %195 = arith.mulf %194, %92 : f32
    %196 = arith.subf %61, %195 : f32
    %197 = arith.mulf %127, %59 : f32
    %198 = arith.mulf %132, %61 : f32
    %199 = arith.addf %197, %198 : f32
    %200 = arith.mulf %137, %62 : f32
    %201 = arith.addf %199, %200 : f32
    %202 = arith.mulf %201, %92 : f32
    %203 = arith.subf %62, %202 : f32
    %c3_i32_17 = arith.constant 3 : i32
    %204 = arith.muli %c3_i32_17, %c1_i32 : i32
    %c0_i32_18 = arith.constant 0 : i32
    %205 = arith.addi %204, %c0_i32_18 : i32
    %206 = arith.index_cast %205 : i32 to index
    %207 = memref.load %arg1[%206] : memref<24xf32, #tpu.memory_space<smem>>
    memref.store %147, %arg1[%206] : memref<24xf32, #tpu.memory_space<smem>>
    %c3_i32_19 = arith.constant 3 : i32
    %208 = arith.muli %c3_i32_19, %c1_i32 : i32
    %c1_i32_20 = arith.constant 1 : i32
    %209 = arith.addi %208, %c1_i32_20 : i32
    %210 = arith.index_cast %209 : i32 to index
    %211 = memref.load %arg1[%210] : memref<24xf32, #tpu.memory_space<smem>>
    memref.store %154, %arg1[%210] : memref<24xf32, #tpu.memory_space<smem>>
    %c3_i32_21 = arith.constant 3 : i32
    %212 = arith.muli %c3_i32_21, %c1_i32 : i32
    %c2_i32_22 = arith.constant 2 : i32
    %213 = arith.addi %212, %c2_i32_22 : i32
    %214 = arith.index_cast %213 : i32 to index
    %215 = memref.load %arg1[%214] : memref<24xf32, #tpu.memory_space<smem>>
    memref.store %161, %arg1[%214] : memref<24xf32, #tpu.memory_space<smem>>
    %c2_i32_23 = arith.constant 2 : i32
    %c13_i32_24 = arith.constant 13 : i32
    %216 = arith.muli %c13_i32_24, %c2_i32_23 : i32
    %c6_i32_25 = arith.constant 6 : i32
    %217 = arith.addi %c6_i32_25, %216 : i32
    %c0_i32_26 = arith.constant 0 : i32
    %218 = arith.addi %217, %c0_i32_26 : i32
    %219 = arith.index_cast %218 : i32 to index
    %220 = memref.load %arg0[%219] : memref<110xf32, #tpu.memory_space<smem>>
    %221 = arith.mulf %220, %220 : f32
    %c1_i32_27 = arith.constant 1 : i32
    %222 = arith.addi %217, %c1_i32_27 : i32
    %223 = arith.index_cast %222 : i32 to index
    %224 = memref.load %arg0[%223] : memref<110xf32, #tpu.memory_space<smem>>
    %225 = arith.mulf %224, %221 : f32
    %226 = arith.addf %147, %225 : f32
    %c2_i32_28 = arith.constant 2 : i32
    %227 = arith.addi %217, %c2_i32_28 : i32
    %228 = arith.index_cast %227 : i32 to index
    %229 = memref.load %arg0[%228] : memref<110xf32, #tpu.memory_space<smem>>
    %230 = arith.mulf %229, %221 : f32
    %231 = arith.addf %154, %230 : f32
    %c3_i32_29 = arith.constant 3 : i32
    %232 = arith.addi %217, %c3_i32_29 : i32
    %233 = arith.index_cast %232 : i32 to index
    %234 = memref.load %arg0[%233] : memref<110xf32, #tpu.memory_space<smem>>
    %235 = arith.mulf %234, %221 : f32
    %236 = arith.addf %161, %235 : f32
    %c4_i32_30 = arith.constant 4 : i32
    %237 = arith.addi %217, %c4_i32_30 : i32
    %238 = arith.index_cast %237 : i32 to index
    %239 = memref.load %arg0[%238] : memref<110xf32, #tpu.memory_space<smem>>
    %c5_i32_31 = arith.constant 5 : i32
    %240 = arith.addi %217, %c5_i32_31 : i32
    %241 = arith.index_cast %240 : i32 to index
    %242 = memref.load %arg0[%241] : memref<110xf32, #tpu.memory_space<smem>>
    %c6_i32_32 = arith.constant 6 : i32
    %243 = arith.addi %217, %c6_i32_32 : i32
    %244 = arith.index_cast %243 : i32 to index
    %245 = memref.load %arg0[%244] : memref<110xf32, #tpu.memory_space<smem>>
    %c7_i32_33 = arith.constant 7 : i32
    %246 = arith.addi %217, %c7_i32_33 : i32
    %247 = arith.index_cast %246 : i32 to index
    %248 = memref.load %arg0[%247] : memref<110xf32, #tpu.memory_space<smem>>
    %c8_i32_34 = arith.constant 8 : i32
    %249 = arith.addi %217, %c8_i32_34 : i32
    %250 = arith.index_cast %249 : i32 to index
    %251 = memref.load %arg0[%250] : memref<110xf32, #tpu.memory_space<smem>>
    %c9_i32_35 = arith.constant 9 : i32
    %252 = arith.addi %217, %c9_i32_35 : i32
    %253 = arith.index_cast %252 : i32 to index
    %254 = memref.load %arg0[%253] : memref<110xf32, #tpu.memory_space<smem>>
    %c10_i32_36 = arith.constant 10 : i32
    %255 = arith.addi %217, %c10_i32_36 : i32
    %256 = arith.index_cast %255 : i32 to index
    %257 = memref.load %arg0[%256] : memref<110xf32, #tpu.memory_space<smem>>
    %c11_i32_37 = arith.constant 11 : i32
    %258 = arith.addi %217, %c11_i32_37 : i32
    %259 = arith.index_cast %258 : i32 to index
    %260 = memref.load %arg0[%259] : memref<110xf32, #tpu.memory_space<smem>>
    %c12_i32_38 = arith.constant 12 : i32
    %261 = arith.addi %217, %c12_i32_38 : i32
    %262 = arith.index_cast %261 : i32 to index
    %263 = memref.load %arg0[%262] : memref<110xf32, #tpu.memory_space<smem>>
    %264 = arith.addf %168, %3 : f32
    %265 = arith.addf %175, %6 : f32
    %266 = arith.addf %182, %7 : f32
    %267 = arith.addf %189, %4 : f32
    %268 = arith.addf %196, %8 : f32
    %269 = arith.addf %203, %5 : f32
    %270 = arith.addf %264, %248 : f32
    %271 = arith.addf %265, %251 : f32
    %272 = arith.addf %266, %254 : f32
    %273 = arith.addf %267, %257 : f32
    %274 = arith.addf %268, %260 : f32
    %275 = arith.addf %269, %263 : f32
    %276 = arith.mulf %273, %275 : f32
    %277 = arith.mulf %274, %274 : f32
    %278 = arith.subf %276, %277 : f32
    %279 = arith.mulf %272, %274 : f32
    %280 = arith.mulf %271, %275 : f32
    %281 = arith.subf %279, %280 : f32
    %282 = arith.mulf %271, %274 : f32
    %283 = arith.mulf %272, %273 : f32
    %284 = arith.subf %282, %283 : f32
    %285 = arith.mulf %270, %275 : f32
    %286 = arith.mulf %272, %272 : f32
    %287 = arith.subf %285, %286 : f32
    %288 = arith.mulf %271, %272 : f32
    %289 = arith.mulf %270, %274 : f32
    %290 = arith.subf %288, %289 : f32
    %291 = arith.mulf %270, %273 : f32
    %292 = arith.mulf %271, %271 : f32
    %293 = arith.subf %291, %292 : f32
    %294 = arith.mulf %270, %278 : f32
    %295 = arith.mulf %271, %281 : f32
    %296 = arith.addf %294, %295 : f32
    %297 = arith.mulf %272, %284 : f32
    %298 = arith.addf %296, %297 : f32
    %299 = arith.divf %cst_5, %298 : f32
    %300 = arith.mulf %264, %278 : f32
    %301 = arith.mulf %265, %281 : f32
    %302 = arith.addf %300, %301 : f32
    %303 = arith.mulf %266, %284 : f32
    %304 = arith.addf %302, %303 : f32
    %305 = arith.mulf %264, %281 : f32
    %306 = arith.mulf %265, %287 : f32
    %307 = arith.addf %305, %306 : f32
    %308 = arith.mulf %266, %290 : f32
    %309 = arith.addf %307, %308 : f32
    %310 = arith.mulf %264, %284 : f32
    %311 = arith.mulf %265, %290 : f32
    %312 = arith.addf %310, %311 : f32
    %313 = arith.mulf %266, %293 : f32
    %314 = arith.addf %312, %313 : f32
    %315 = arith.mulf %265, %278 : f32
    %316 = arith.mulf %267, %281 : f32
    %317 = arith.addf %315, %316 : f32
    %318 = arith.mulf %268, %284 : f32
    %319 = arith.addf %317, %318 : f32
    %320 = arith.mulf %265, %281 : f32
    %321 = arith.mulf %267, %287 : f32
    %322 = arith.addf %320, %321 : f32
    %323 = arith.mulf %268, %290 : f32
    %324 = arith.addf %322, %323 : f32
    %325 = arith.mulf %265, %284 : f32
    %326 = arith.mulf %267, %290 : f32
    %327 = arith.addf %325, %326 : f32
    %328 = arith.mulf %268, %293 : f32
    %329 = arith.addf %327, %328 : f32
    %330 = arith.mulf %266, %278 : f32
    %331 = arith.mulf %268, %281 : f32
    %332 = arith.addf %330, %331 : f32
    %333 = arith.mulf %269, %284 : f32
    %334 = arith.addf %332, %333 : f32
    %335 = arith.mulf %266, %281 : f32
    %336 = arith.mulf %268, %287 : f32
    %337 = arith.addf %335, %336 : f32
    %338 = arith.mulf %269, %290 : f32
    %339 = arith.addf %337, %338 : f32
    %340 = arith.mulf %266, %284 : f32
    %341 = arith.mulf %268, %290 : f32
    %342 = arith.addf %340, %341 : f32
    %343 = arith.mulf %269, %293 : f32
    %344 = arith.addf %342, %343 : f32
    %345 = arith.subf %239, %226 : f32
    %346 = arith.subf %242, %231 : f32
    %347 = arith.subf %245, %236 : f32
    %348 = arith.mulf %304, %345 : f32
    %349 = arith.mulf %309, %346 : f32
    %350 = arith.addf %348, %349 : f32
    %351 = arith.mulf %314, %347 : f32
    %352 = arith.addf %350, %351 : f32
    %353 = arith.mulf %352, %299 : f32
    %354 = arith.addf %226, %353 : f32
    %355 = arith.mulf %319, %345 : f32
    %356 = arith.mulf %324, %346 : f32
    %357 = arith.addf %355, %356 : f32
    %358 = arith.mulf %329, %347 : f32
    %359 = arith.addf %357, %358 : f32
    %360 = arith.mulf %359, %299 : f32
    %361 = arith.addf %231, %360 : f32
    %362 = arith.mulf %334, %345 : f32
    %363 = arith.mulf %339, %346 : f32
    %364 = arith.addf %362, %363 : f32
    %365 = arith.mulf %344, %347 : f32
    %366 = arith.addf %364, %365 : f32
    %367 = arith.mulf %366, %299 : f32
    %368 = arith.addf %236, %367 : f32
    %369 = arith.mulf %304, %264 : f32
    %370 = arith.mulf %309, %265 : f32
    %371 = arith.addf %369, %370 : f32
    %372 = arith.mulf %314, %266 : f32
    %373 = arith.addf %371, %372 : f32
    %374 = arith.mulf %373, %299 : f32
    %375 = arith.subf %264, %374 : f32
    %376 = arith.mulf %304, %265 : f32
    %377 = arith.mulf %309, %267 : f32
    %378 = arith.addf %376, %377 : f32
    %379 = arith.mulf %314, %268 : f32
    %380 = arith.addf %378, %379 : f32
    %381 = arith.mulf %380, %299 : f32
    %382 = arith.subf %265, %381 : f32
    %383 = arith.mulf %304, %266 : f32
    %384 = arith.mulf %309, %268 : f32
    %385 = arith.addf %383, %384 : f32
    %386 = arith.mulf %314, %269 : f32
    %387 = arith.addf %385, %386 : f32
    %388 = arith.mulf %387, %299 : f32
    %389 = arith.subf %266, %388 : f32
    %390 = arith.mulf %319, %265 : f32
    %391 = arith.mulf %324, %267 : f32
    %392 = arith.addf %390, %391 : f32
    %393 = arith.mulf %329, %268 : f32
    %394 = arith.addf %392, %393 : f32
    %395 = arith.mulf %394, %299 : f32
    %396 = arith.subf %267, %395 : f32
    %397 = arith.mulf %319, %266 : f32
    %398 = arith.mulf %324, %268 : f32
    %399 = arith.addf %397, %398 : f32
    %400 = arith.mulf %329, %269 : f32
    %401 = arith.addf %399, %400 : f32
    %402 = arith.mulf %401, %299 : f32
    %403 = arith.subf %268, %402 : f32
    %404 = arith.mulf %334, %266 : f32
    %405 = arith.mulf %339, %268 : f32
    %406 = arith.addf %404, %405 : f32
    %407 = arith.mulf %344, %269 : f32
    %408 = arith.addf %406, %407 : f32
    %409 = arith.mulf %408, %299 : f32
    %410 = arith.subf %269, %409 : f32
    %c3_i32_39 = arith.constant 3 : i32
    %411 = arith.muli %c3_i32_39, %c2_i32_23 : i32
    %c0_i32_40 = arith.constant 0 : i32
    %412 = arith.addi %411, %c0_i32_40 : i32
    %413 = arith.index_cast %412 : i32 to index
    %414 = memref.load %arg1[%413] : memref<24xf32, #tpu.memory_space<smem>>
    memref.store %354, %arg1[%413] : memref<24xf32, #tpu.memory_space<smem>>
    %c3_i32_41 = arith.constant 3 : i32
    %415 = arith.muli %c3_i32_41, %c2_i32_23 : i32
    %c1_i32_42 = arith.constant 1 : i32
    %416 = arith.addi %415, %c1_i32_42 : i32
    %417 = arith.index_cast %416 : i32 to index
    %418 = memref.load %arg1[%417] : memref<24xf32, #tpu.memory_space<smem>>
    memref.store %361, %arg1[%417] : memref<24xf32, #tpu.memory_space<smem>>
    %c3_i32_43 = arith.constant 3 : i32
    %419 = arith.muli %c3_i32_43, %c2_i32_23 : i32
    %c2_i32_44 = arith.constant 2 : i32
    %420 = arith.addi %419, %c2_i32_44 : i32
    %421 = arith.index_cast %420 : i32 to index
    %422 = memref.load %arg1[%421] : memref<24xf32, #tpu.memory_space<smem>>
    memref.store %368, %arg1[%421] : memref<24xf32, #tpu.memory_space<smem>>
    %c3_i32_45 = arith.constant 3 : i32
    %c13_i32_46 = arith.constant 13 : i32
    %423 = arith.muli %c13_i32_46, %c3_i32_45 : i32
    %c6_i32_47 = arith.constant 6 : i32
    %424 = arith.addi %c6_i32_47, %423 : i32
    %c0_i32_48 = arith.constant 0 : i32
    %425 = arith.addi %424, %c0_i32_48 : i32
    %426 = arith.index_cast %425 : i32 to index
    %427 = memref.load %arg0[%426] : memref<110xf32, #tpu.memory_space<smem>>
    %428 = arith.mulf %427, %427 : f32
    %c1_i32_49 = arith.constant 1 : i32
    %429 = arith.addi %424, %c1_i32_49 : i32
    %430 = arith.index_cast %429 : i32 to index
    %431 = memref.load %arg0[%430] : memref<110xf32, #tpu.memory_space<smem>>
    %432 = arith.mulf %431, %428 : f32
    %433 = arith.addf %354, %432 : f32
    %c2_i32_50 = arith.constant 2 : i32
    %434 = arith.addi %424, %c2_i32_50 : i32
    %435 = arith.index_cast %434 : i32 to index
    %436 = memref.load %arg0[%435] : memref<110xf32, #tpu.memory_space<smem>>
    %437 = arith.mulf %436, %428 : f32
    %438 = arith.addf %361, %437 : f32
    %c3_i32_51 = arith.constant 3 : i32
    %439 = arith.addi %424, %c3_i32_51 : i32
    %440 = arith.index_cast %439 : i32 to index
    %441 = memref.load %arg0[%440] : memref<110xf32, #tpu.memory_space<smem>>
    %442 = arith.mulf %441, %428 : f32
    %443 = arith.addf %368, %442 : f32
    %c4_i32_52 = arith.constant 4 : i32
    %444 = arith.addi %424, %c4_i32_52 : i32
    %445 = arith.index_cast %444 : i32 to index
    %446 = memref.load %arg0[%445] : memref<110xf32, #tpu.memory_space<smem>>
    %c5_i32_53 = arith.constant 5 : i32
    %447 = arith.addi %424, %c5_i32_53 : i32
    %448 = arith.index_cast %447 : i32 to index
    %449 = memref.load %arg0[%448] : memref<110xf32, #tpu.memory_space<smem>>
    %c6_i32_54 = arith.constant 6 : i32
    %450 = arith.addi %424, %c6_i32_54 : i32
    %451 = arith.index_cast %450 : i32 to index
    %452 = memref.load %arg0[%451] : memref<110xf32, #tpu.memory_space<smem>>
    %c7_i32_55 = arith.constant 7 : i32
    %453 = arith.addi %424, %c7_i32_55 : i32
    %454 = arith.index_cast %453 : i32 to index
    %455 = memref.load %arg0[%454] : memref<110xf32, #tpu.memory_space<smem>>
    %c8_i32_56 = arith.constant 8 : i32
    %456 = arith.addi %424, %c8_i32_56 : i32
    %457 = arith.index_cast %456 : i32 to index
    %458 = memref.load %arg0[%457] : memref<110xf32, #tpu.memory_space<smem>>
    %c9_i32_57 = arith.constant 9 : i32
    %459 = arith.addi %424, %c9_i32_57 : i32
    %460 = arith.index_cast %459 : i32 to index
    %461 = memref.load %arg0[%460] : memref<110xf32, #tpu.memory_space<smem>>
    %c10_i32_58 = arith.constant 10 : i32
    %462 = arith.addi %424, %c10_i32_58 : i32
    %463 = arith.index_cast %462 : i32 to index
    %464 = memref.load %arg0[%463] : memref<110xf32, #tpu.memory_space<smem>>
    %c11_i32_59 = arith.constant 11 : i32
    %465 = arith.addi %424, %c11_i32_59 : i32
    %466 = arith.index_cast %465 : i32 to index
    %467 = memref.load %arg0[%466] : memref<110xf32, #tpu.memory_space<smem>>
    %c12_i32_60 = arith.constant 12 : i32
    %468 = arith.addi %424, %c12_i32_60 : i32
    %469 = arith.index_cast %468 : i32 to index
    %470 = memref.load %arg0[%469] : memref<110xf32, #tpu.memory_space<smem>>
    %471 = arith.addf %375, %3 : f32
    %472 = arith.addf %382, %6 : f32
    %473 = arith.addf %389, %7 : f32
    %474 = arith.addf %396, %4 : f32
    %475 = arith.addf %403, %8 : f32
    %476 = arith.addf %410, %5 : f32
    %477 = arith.addf %471, %455 : f32
    %478 = arith.addf %472, %458 : f32
    %479 = arith.addf %473, %461 : f32
    %480 = arith.addf %474, %464 : f32
    %481 = arith.addf %475, %467 : f32
    %482 = arith.addf %476, %470 : f32
    %483 = arith.mulf %480, %482 : f32
    %484 = arith.mulf %481, %481 : f32
    %485 = arith.subf %483, %484 : f32
    %486 = arith.mulf %479, %481 : f32
    %487 = arith.mulf %478, %482 : f32
    %488 = arith.subf %486, %487 : f32
    %489 = arith.mulf %478, %481 : f32
    %490 = arith.mulf %479, %480 : f32
    %491 = arith.subf %489, %490 : f32
    %492 = arith.mulf %477, %482 : f32
    %493 = arith.mulf %479, %479 : f32
    %494 = arith.subf %492, %493 : f32
    %495 = arith.mulf %478, %479 : f32
    %496 = arith.mulf %477, %481 : f32
    %497 = arith.subf %495, %496 : f32
    %498 = arith.mulf %477, %480 : f32
    %499 = arith.mulf %478, %478 : f32
    %500 = arith.subf %498, %499 : f32
    %501 = arith.mulf %477, %485 : f32
    %502 = arith.mulf %478, %488 : f32
    %503 = arith.addf %501, %502 : f32
    %504 = arith.mulf %479, %491 : f32
    %505 = arith.addf %503, %504 : f32
    %506 = arith.divf %cst_5, %505 : f32
    %507 = arith.mulf %471, %485 : f32
    %508 = arith.mulf %472, %488 : f32
    %509 = arith.addf %507, %508 : f32
    %510 = arith.mulf %473, %491 : f32
    %511 = arith.addf %509, %510 : f32
    %512 = arith.mulf %471, %488 : f32
    %513 = arith.mulf %472, %494 : f32
    %514 = arith.addf %512, %513 : f32
    %515 = arith.mulf %473, %497 : f32
    %516 = arith.addf %514, %515 : f32
    %517 = arith.mulf %471, %491 : f32
    %518 = arith.mulf %472, %497 : f32
    %519 = arith.addf %517, %518 : f32
    %520 = arith.mulf %473, %500 : f32
    %521 = arith.addf %519, %520 : f32
    %522 = arith.mulf %472, %485 : f32
    %523 = arith.mulf %474, %488 : f32
    %524 = arith.addf %522, %523 : f32
    %525 = arith.mulf %475, %491 : f32
    %526 = arith.addf %524, %525 : f32
    %527 = arith.mulf %472, %488 : f32
    %528 = arith.mulf %474, %494 : f32
    %529 = arith.addf %527, %528 : f32
    %530 = arith.mulf %475, %497 : f32
    %531 = arith.addf %529, %530 : f32
    %532 = arith.mulf %472, %491 : f32
    %533 = arith.mulf %474, %497 : f32
    %534 = arith.addf %532, %533 : f32
    %535 = arith.mulf %475, %500 : f32
    %536 = arith.addf %534, %535 : f32
    %537 = arith.mulf %473, %485 : f32
    %538 = arith.mulf %475, %488 : f32
    %539 = arith.addf %537, %538 : f32
    %540 = arith.mulf %476, %491 : f32
    %541 = arith.addf %539, %540 : f32
    %542 = arith.mulf %473, %488 : f32
    %543 = arith.mulf %475, %494 : f32
    %544 = arith.addf %542, %543 : f32
    %545 = arith.mulf %476, %497 : f32
    %546 = arith.addf %544, %545 : f32
    %547 = arith.mulf %473, %491 : f32
    %548 = arith.mulf %475, %497 : f32
    %549 = arith.addf %547, %548 : f32
    %550 = arith.mulf %476, %500 : f32
    %551 = arith.addf %549, %550 : f32
    %552 = arith.subf %446, %433 : f32
    %553 = arith.subf %449, %438 : f32
    %554 = arith.subf %452, %443 : f32
    %555 = arith.mulf %511, %552 : f32
    %556 = arith.mulf %516, %553 : f32
    %557 = arith.addf %555, %556 : f32
    %558 = arith.mulf %521, %554 : f32
    %559 = arith.addf %557, %558 : f32
    %560 = arith.mulf %559, %506 : f32
    %561 = arith.addf %433, %560 : f32
    %562 = arith.mulf %526, %552 : f32
    %563 = arith.mulf %531, %553 : f32
    %564 = arith.addf %562, %563 : f32
    %565 = arith.mulf %536, %554 : f32
    %566 = arith.addf %564, %565 : f32
    %567 = arith.mulf %566, %506 : f32
    %568 = arith.addf %438, %567 : f32
    %569 = arith.mulf %541, %552 : f32
    %570 = arith.mulf %546, %553 : f32
    %571 = arith.addf %569, %570 : f32
    %572 = arith.mulf %551, %554 : f32
    %573 = arith.addf %571, %572 : f32
    %574 = arith.mulf %573, %506 : f32
    %575 = arith.addf %443, %574 : f32
    %576 = arith.mulf %511, %471 : f32
    %577 = arith.mulf %516, %472 : f32
    %578 = arith.addf %576, %577 : f32
    %579 = arith.mulf %521, %473 : f32
    %580 = arith.addf %578, %579 : f32
    %581 = arith.mulf %580, %506 : f32
    %582 = arith.subf %471, %581 : f32
    %583 = arith.mulf %511, %472 : f32
    %584 = arith.mulf %516, %474 : f32
    %585 = arith.addf %583, %584 : f32
    %586 = arith.mulf %521, %475 : f32
    %587 = arith.addf %585, %586 : f32
    %588 = arith.mulf %587, %506 : f32
    %589 = arith.subf %472, %588 : f32
    %590 = arith.mulf %511, %473 : f32
    %591 = arith.mulf %516, %475 : f32
    %592 = arith.addf %590, %591 : f32
    %593 = arith.mulf %521, %476 : f32
    %594 = arith.addf %592, %593 : f32
    %595 = arith.mulf %594, %506 : f32
    %596 = arith.subf %473, %595 : f32
    %597 = arith.mulf %526, %472 : f32
    %598 = arith.mulf %531, %474 : f32
    %599 = arith.addf %597, %598 : f32
    %600 = arith.mulf %536, %475 : f32
    %601 = arith.addf %599, %600 : f32
    %602 = arith.mulf %601, %506 : f32
    %603 = arith.subf %474, %602 : f32
    %604 = arith.mulf %526, %473 : f32
    %605 = arith.mulf %531, %475 : f32
    %606 = arith.addf %604, %605 : f32
    %607 = arith.mulf %536, %476 : f32
    %608 = arith.addf %606, %607 : f32
    %609 = arith.mulf %608, %506 : f32
    %610 = arith.subf %475, %609 : f32
    %611 = arith.mulf %541, %473 : f32
    %612 = arith.mulf %546, %475 : f32
    %613 = arith.addf %611, %612 : f32
    %614 = arith.mulf %551, %476 : f32
    %615 = arith.addf %613, %614 : f32
    %616 = arith.mulf %615, %506 : f32
    %617 = arith.subf %476, %616 : f32
    %c3_i32_61 = arith.constant 3 : i32
    %618 = arith.muli %c3_i32_61, %c3_i32_45 : i32
    %c0_i32_62 = arith.constant 0 : i32
    %619 = arith.addi %618, %c0_i32_62 : i32
    %620 = arith.index_cast %619 : i32 to index
    %621 = memref.load %arg1[%620] : memref<24xf32, #tpu.memory_space<smem>>
    memref.store %561, %arg1[%620] : memref<24xf32, #tpu.memory_space<smem>>
    %c3_i32_63 = arith.constant 3 : i32
    %622 = arith.muli %c3_i32_63, %c3_i32_45 : i32
    %c1_i32_64 = arith.constant 1 : i32
    %623 = arith.addi %622, %c1_i32_64 : i32
    %624 = arith.index_cast %623 : i32 to index
    %625 = memref.load %arg1[%624] : memref<24xf32, #tpu.memory_space<smem>>
    memref.store %568, %arg1[%624] : memref<24xf32, #tpu.memory_space<smem>>
    %c3_i32_65 = arith.constant 3 : i32
    %626 = arith.muli %c3_i32_65, %c3_i32_45 : i32
    %c2_i32_66 = arith.constant 2 : i32
    %627 = arith.addi %626, %c2_i32_66 : i32
    %628 = arith.index_cast %627 : i32 to index
    %629 = memref.load %arg1[%628] : memref<24xf32, #tpu.memory_space<smem>>
    memref.store %575, %arg1[%628] : memref<24xf32, #tpu.memory_space<smem>>
    %c4_i32_67 = arith.constant 4 : i32
    %c13_i32_68 = arith.constant 13 : i32
    %630 = arith.muli %c13_i32_68, %c4_i32_67 : i32
    %c6_i32_69 = arith.constant 6 : i32
    %631 = arith.addi %c6_i32_69, %630 : i32
    %c0_i32_70 = arith.constant 0 : i32
    %632 = arith.addi %631, %c0_i32_70 : i32
    %633 = arith.index_cast %632 : i32 to index
    %634 = memref.load %arg0[%633] : memref<110xf32, #tpu.memory_space<smem>>
    %635 = arith.mulf %634, %634 : f32
    %c1_i32_71 = arith.constant 1 : i32
    %636 = arith.addi %631, %c1_i32_71 : i32
    %637 = arith.index_cast %636 : i32 to index
    %638 = memref.load %arg0[%637] : memref<110xf32, #tpu.memory_space<smem>>
    %639 = arith.mulf %638, %635 : f32
    %640 = arith.addf %561, %639 : f32
    %c2_i32_72 = arith.constant 2 : i32
    %641 = arith.addi %631, %c2_i32_72 : i32
    %642 = arith.index_cast %641 : i32 to index
    %643 = memref.load %arg0[%642] : memref<110xf32, #tpu.memory_space<smem>>
    %644 = arith.mulf %643, %635 : f32
    %645 = arith.addf %568, %644 : f32
    %c3_i32_73 = arith.constant 3 : i32
    %646 = arith.addi %631, %c3_i32_73 : i32
    %647 = arith.index_cast %646 : i32 to index
    %648 = memref.load %arg0[%647] : memref<110xf32, #tpu.memory_space<smem>>
    %649 = arith.mulf %648, %635 : f32
    %650 = arith.addf %575, %649 : f32
    %c4_i32_74 = arith.constant 4 : i32
    %651 = arith.addi %631, %c4_i32_74 : i32
    %652 = arith.index_cast %651 : i32 to index
    %653 = memref.load %arg0[%652] : memref<110xf32, #tpu.memory_space<smem>>
    %c5_i32_75 = arith.constant 5 : i32
    %654 = arith.addi %631, %c5_i32_75 : i32
    %655 = arith.index_cast %654 : i32 to index
    %656 = memref.load %arg0[%655] : memref<110xf32, #tpu.memory_space<smem>>
    %c6_i32_76 = arith.constant 6 : i32
    %657 = arith.addi %631, %c6_i32_76 : i32
    %658 = arith.index_cast %657 : i32 to index
    %659 = memref.load %arg0[%658] : memref<110xf32, #tpu.memory_space<smem>>
    %c7_i32_77 = arith.constant 7 : i32
    %660 = arith.addi %631, %c7_i32_77 : i32
    %661 = arith.index_cast %660 : i32 to index
    %662 = memref.load %arg0[%661] : memref<110xf32, #tpu.memory_space<smem>>
    %c8_i32_78 = arith.constant 8 : i32
    %663 = arith.addi %631, %c8_i32_78 : i32
    %664 = arith.index_cast %663 : i32 to index
    %665 = memref.load %arg0[%664] : memref<110xf32, #tpu.memory_space<smem>>
    %c9_i32_79 = arith.constant 9 : i32
    %666 = arith.addi %631, %c9_i32_79 : i32
    %667 = arith.index_cast %666 : i32 to index
    %668 = memref.load %arg0[%667] : memref<110xf32, #tpu.memory_space<smem>>
    %c10_i32_80 = arith.constant 10 : i32
    %669 = arith.addi %631, %c10_i32_80 : i32
    %670 = arith.index_cast %669 : i32 to index
    %671 = memref.load %arg0[%670] : memref<110xf32, #tpu.memory_space<smem>>
    %c11_i32_81 = arith.constant 11 : i32
    %672 = arith.addi %631, %c11_i32_81 : i32
    %673 = arith.index_cast %672 : i32 to index
    %674 = memref.load %arg0[%673] : memref<110xf32, #tpu.memory_space<smem>>
    %c12_i32_82 = arith.constant 12 : i32
    %675 = arith.addi %631, %c12_i32_82 : i32
    %676 = arith.index_cast %675 : i32 to index
    %677 = memref.load %arg0[%676] : memref<110xf32, #tpu.memory_space<smem>>
    %678 = arith.addf %582, %3 : f32
    %679 = arith.addf %589, %6 : f32
    %680 = arith.addf %596, %7 : f32
    %681 = arith.addf %603, %4 : f32
    %682 = arith.addf %610, %8 : f32
    %683 = arith.addf %617, %5 : f32
    %684 = arith.addf %678, %662 : f32
    %685 = arith.addf %679, %665 : f32
    %686 = arith.addf %680, %668 : f32
    %687 = arith.addf %681, %671 : f32
    %688 = arith.addf %682, %674 : f32
    %689 = arith.addf %683, %677 : f32
    %690 = arith.mulf %687, %689 : f32
    %691 = arith.mulf %688, %688 : f32
    %692 = arith.subf %690, %691 : f32
    %693 = arith.mulf %686, %688 : f32
    %694 = arith.mulf %685, %689 : f32
    %695 = arith.subf %693, %694 : f32
    %696 = arith.mulf %685, %688 : f32
    %697 = arith.mulf %686, %687 : f32
    %698 = arith.subf %696, %697 : f32
    %699 = arith.mulf %684, %689 : f32
    %700 = arith.mulf %686, %686 : f32
    %701 = arith.subf %699, %700 : f32
    %702 = arith.mulf %685, %686 : f32
    %703 = arith.mulf %684, %688 : f32
    %704 = arith.subf %702, %703 : f32
    %705 = arith.mulf %684, %687 : f32
    %706 = arith.mulf %685, %685 : f32
    %707 = arith.subf %705, %706 : f32
    %708 = arith.mulf %684, %692 : f32
    %709 = arith.mulf %685, %695 : f32
    %710 = arith.addf %708, %709 : f32
    %711 = arith.mulf %686, %698 : f32
    %712 = arith.addf %710, %711 : f32
    %713 = arith.divf %cst_5, %712 : f32
    %714 = arith.mulf %678, %692 : f32
    %715 = arith.mulf %679, %695 : f32
    %716 = arith.addf %714, %715 : f32
    %717 = arith.mulf %680, %698 : f32
    %718 = arith.addf %716, %717 : f32
    %719 = arith.mulf %678, %695 : f32
    %720 = arith.mulf %679, %701 : f32
    %721 = arith.addf %719, %720 : f32
    %722 = arith.mulf %680, %704 : f32
    %723 = arith.addf %721, %722 : f32
    %724 = arith.mulf %678, %698 : f32
    %725 = arith.mulf %679, %704 : f32
    %726 = arith.addf %724, %725 : f32
    %727 = arith.mulf %680, %707 : f32
    %728 = arith.addf %726, %727 : f32
    %729 = arith.mulf %679, %692 : f32
    %730 = arith.mulf %681, %695 : f32
    %731 = arith.addf %729, %730 : f32
    %732 = arith.mulf %682, %698 : f32
    %733 = arith.addf %731, %732 : f32
    %734 = arith.mulf %679, %695 : f32
    %735 = arith.mulf %681, %701 : f32
    %736 = arith.addf %734, %735 : f32
    %737 = arith.mulf %682, %704 : f32
    %738 = arith.addf %736, %737 : f32
    %739 = arith.mulf %679, %698 : f32
    %740 = arith.mulf %681, %704 : f32
    %741 = arith.addf %739, %740 : f32
    %742 = arith.mulf %682, %707 : f32
    %743 = arith.addf %741, %742 : f32
    %744 = arith.mulf %680, %692 : f32
    %745 = arith.mulf %682, %695 : f32
    %746 = arith.addf %744, %745 : f32
    %747 = arith.mulf %683, %698 : f32
    %748 = arith.addf %746, %747 : f32
    %749 = arith.mulf %680, %695 : f32
    %750 = arith.mulf %682, %701 : f32
    %751 = arith.addf %749, %750 : f32
    %752 = arith.mulf %683, %704 : f32
    %753 = arith.addf %751, %752 : f32
    %754 = arith.mulf %680, %698 : f32
    %755 = arith.mulf %682, %704 : f32
    %756 = arith.addf %754, %755 : f32
    %757 = arith.mulf %683, %707 : f32
    %758 = arith.addf %756, %757 : f32
    %759 = arith.subf %653, %640 : f32
    %760 = arith.subf %656, %645 : f32
    %761 = arith.subf %659, %650 : f32
    %762 = arith.mulf %718, %759 : f32
    %763 = arith.mulf %723, %760 : f32
    %764 = arith.addf %762, %763 : f32
    %765 = arith.mulf %728, %761 : f32
    %766 = arith.addf %764, %765 : f32
    %767 = arith.mulf %766, %713 : f32
    %768 = arith.addf %640, %767 : f32
    %769 = arith.mulf %733, %759 : f32
    %770 = arith.mulf %738, %760 : f32
    %771 = arith.addf %769, %770 : f32
    %772 = arith.mulf %743, %761 : f32
    %773 = arith.addf %771, %772 : f32
    %774 = arith.mulf %773, %713 : f32
    %775 = arith.addf %645, %774 : f32
    %776 = arith.mulf %748, %759 : f32
    %777 = arith.mulf %753, %760 : f32
    %778 = arith.addf %776, %777 : f32
    %779 = arith.mulf %758, %761 : f32
    %780 = arith.addf %778, %779 : f32
    %781 = arith.mulf %780, %713 : f32
    %782 = arith.addf %650, %781 : f32
    %783 = arith.mulf %718, %678 : f32
    %784 = arith.mulf %723, %679 : f32
    %785 = arith.addf %783, %784 : f32
    %786 = arith.mulf %728, %680 : f32
    %787 = arith.addf %785, %786 : f32
    %788 = arith.mulf %787, %713 : f32
    %789 = arith.subf %678, %788 : f32
    %790 = arith.mulf %718, %679 : f32
    %791 = arith.mulf %723, %681 : f32
    %792 = arith.addf %790, %791 : f32
    %793 = arith.mulf %728, %682 : f32
    %794 = arith.addf %792, %793 : f32
    %795 = arith.mulf %794, %713 : f32
    %796 = arith.subf %679, %795 : f32
    %797 = arith.mulf %718, %680 : f32
    %798 = arith.mulf %723, %682 : f32
    %799 = arith.addf %797, %798 : f32
    %800 = arith.mulf %728, %683 : f32
    %801 = arith.addf %799, %800 : f32
    %802 = arith.mulf %801, %713 : f32
    %803 = arith.subf %680, %802 : f32
    %804 = arith.mulf %733, %679 : f32
    %805 = arith.mulf %738, %681 : f32
    %806 = arith.addf %804, %805 : f32
    %807 = arith.mulf %743, %682 : f32
    %808 = arith.addf %806, %807 : f32
    %809 = arith.mulf %808, %713 : f32
    %810 = arith.subf %681, %809 : f32
    %811 = arith.mulf %733, %680 : f32
    %812 = arith.mulf %738, %682 : f32
    %813 = arith.addf %811, %812 : f32
    %814 = arith.mulf %743, %683 : f32
    %815 = arith.addf %813, %814 : f32
    %816 = arith.mulf %815, %713 : f32
    %817 = arith.subf %682, %816 : f32
    %818 = arith.mulf %748, %680 : f32
    %819 = arith.mulf %753, %682 : f32
    %820 = arith.addf %818, %819 : f32
    %821 = arith.mulf %758, %683 : f32
    %822 = arith.addf %820, %821 : f32
    %823 = arith.mulf %822, %713 : f32
    %824 = arith.subf %683, %823 : f32
    %c3_i32_83 = arith.constant 3 : i32
    %825 = arith.muli %c3_i32_83, %c4_i32_67 : i32
    %c0_i32_84 = arith.constant 0 : i32
    %826 = arith.addi %825, %c0_i32_84 : i32
    %827 = arith.index_cast %826 : i32 to index
    %828 = memref.load %arg1[%827] : memref<24xf32, #tpu.memory_space<smem>>
    memref.store %768, %arg1[%827] : memref<24xf32, #tpu.memory_space<smem>>
    %c3_i32_85 = arith.constant 3 : i32
    %829 = arith.muli %c3_i32_85, %c4_i32_67 : i32
    %c1_i32_86 = arith.constant 1 : i32
    %830 = arith.addi %829, %c1_i32_86 : i32
    %831 = arith.index_cast %830 : i32 to index
    %832 = memref.load %arg1[%831] : memref<24xf32, #tpu.memory_space<smem>>
    memref.store %775, %arg1[%831] : memref<24xf32, #tpu.memory_space<smem>>
    %c3_i32_87 = arith.constant 3 : i32
    %833 = arith.muli %c3_i32_87, %c4_i32_67 : i32
    %c2_i32_88 = arith.constant 2 : i32
    %834 = arith.addi %833, %c2_i32_88 : i32
    %835 = arith.index_cast %834 : i32 to index
    %836 = memref.load %arg1[%835] : memref<24xf32, #tpu.memory_space<smem>>
    memref.store %782, %arg1[%835] : memref<24xf32, #tpu.memory_space<smem>>
    %c5_i32_89 = arith.constant 5 : i32
    %c13_i32_90 = arith.constant 13 : i32
    %837 = arith.muli %c13_i32_90, %c5_i32_89 : i32
    %c6_i32_91 = arith.constant 6 : i32
    %838 = arith.addi %c6_i32_91, %837 : i32
    %c0_i32_92 = arith.constant 0 : i32
    %839 = arith.addi %838, %c0_i32_92 : i32
    %840 = arith.index_cast %839 : i32 to index
    %841 = memref.load %arg0[%840] : memref<110xf32, #tpu.memory_space<smem>>
    %842 = arith.mulf %841, %841 : f32
    %c1_i32_93 = arith.constant 1 : i32
    %843 = arith.addi %838, %c1_i32_93 : i32
    %844 = arith.index_cast %843 : i32 to index
    %845 = memref.load %arg0[%844] : memref<110xf32, #tpu.memory_space<smem>>
    %846 = arith.mulf %845, %842 : f32
    %847 = arith.addf %768, %846 : f32
    %c2_i32_94 = arith.constant 2 : i32
    %848 = arith.addi %838, %c2_i32_94 : i32
    %849 = arith.index_cast %848 : i32 to index
    %850 = memref.load %arg0[%849] : memref<110xf32, #tpu.memory_space<smem>>
    %851 = arith.mulf %850, %842 : f32
    %852 = arith.addf %775, %851 : f32
    %c3_i32_95 = arith.constant 3 : i32
    %853 = arith.addi %838, %c3_i32_95 : i32
    %854 = arith.index_cast %853 : i32 to index
    %855 = memref.load %arg0[%854] : memref<110xf32, #tpu.memory_space<smem>>
    %856 = arith.mulf %855, %842 : f32
    %857 = arith.addf %782, %856 : f32
    %c4_i32_96 = arith.constant 4 : i32
    %858 = arith.addi %838, %c4_i32_96 : i32
    %859 = arith.index_cast %858 : i32 to index
    %860 = memref.load %arg0[%859] : memref<110xf32, #tpu.memory_space<smem>>
    %c5_i32_97 = arith.constant 5 : i32
    %861 = arith.addi %838, %c5_i32_97 : i32
    %862 = arith.index_cast %861 : i32 to index
    %863 = memref.load %arg0[%862] : memref<110xf32, #tpu.memory_space<smem>>
    %c6_i32_98 = arith.constant 6 : i32
    %864 = arith.addi %838, %c6_i32_98 : i32
    %865 = arith.index_cast %864 : i32 to index
    %866 = memref.load %arg0[%865] : memref<110xf32, #tpu.memory_space<smem>>
    %c7_i32_99 = arith.constant 7 : i32
    %867 = arith.addi %838, %c7_i32_99 : i32
    %868 = arith.index_cast %867 : i32 to index
    %869 = memref.load %arg0[%868] : memref<110xf32, #tpu.memory_space<smem>>
    %c8_i32_100 = arith.constant 8 : i32
    %870 = arith.addi %838, %c8_i32_100 : i32
    %871 = arith.index_cast %870 : i32 to index
    %872 = memref.load %arg0[%871] : memref<110xf32, #tpu.memory_space<smem>>
    %c9_i32_101 = arith.constant 9 : i32
    %873 = arith.addi %838, %c9_i32_101 : i32
    %874 = arith.index_cast %873 : i32 to index
    %875 = memref.load %arg0[%874] : memref<110xf32, #tpu.memory_space<smem>>
    %c10_i32_102 = arith.constant 10 : i32
    %876 = arith.addi %838, %c10_i32_102 : i32
    %877 = arith.index_cast %876 : i32 to index
    %878 = memref.load %arg0[%877] : memref<110xf32, #tpu.memory_space<smem>>
    %c11_i32_103 = arith.constant 11 : i32
    %879 = arith.addi %838, %c11_i32_103 : i32
    %880 = arith.index_cast %879 : i32 to index
    %881 = memref.load %arg0[%880] : memref<110xf32, #tpu.memory_space<smem>>
    %c12_i32_104 = arith.constant 12 : i32
    %882 = arith.addi %838, %c12_i32_104 : i32
    %883 = arith.index_cast %882 : i32 to index
    %884 = memref.load %arg0[%883] : memref<110xf32, #tpu.memory_space<smem>>
    %885 = arith.addf %789, %3 : f32
    %886 = arith.addf %796, %6 : f32
    %887 = arith.addf %803, %7 : f32
    %888 = arith.addf %810, %4 : f32
    %889 = arith.addf %817, %8 : f32
    %890 = arith.addf %824, %5 : f32
    %891 = arith.addf %885, %869 : f32
    %892 = arith.addf %886, %872 : f32
    %893 = arith.addf %887, %875 : f32
    %894 = arith.addf %888, %878 : f32
    %895 = arith.addf %889, %881 : f32
    %896 = arith.addf %890, %884 : f32
    %897 = arith.mulf %894, %896 : f32
    %898 = arith.mulf %895, %895 : f32
    %899 = arith.subf %897, %898 : f32
    %900 = arith.mulf %893, %895 : f32
    %901 = arith.mulf %892, %896 : f32
    %902 = arith.subf %900, %901 : f32
    %903 = arith.mulf %892, %895 : f32
    %904 = arith.mulf %893, %894 : f32
    %905 = arith.subf %903, %904 : f32
    %906 = arith.mulf %891, %896 : f32
    %907 = arith.mulf %893, %893 : f32
    %908 = arith.subf %906, %907 : f32
    %909 = arith.mulf %892, %893 : f32
    %910 = arith.mulf %891, %895 : f32
    %911 = arith.subf %909, %910 : f32
    %912 = arith.mulf %891, %894 : f32
    %913 = arith.mulf %892, %892 : f32
    %914 = arith.subf %912, %913 : f32
    %915 = arith.mulf %891, %899 : f32
    %916 = arith.mulf %892, %902 : f32
    %917 = arith.addf %915, %916 : f32
    %918 = arith.mulf %893, %905 : f32
    %919 = arith.addf %917, %918 : f32
    %920 = arith.divf %cst_5, %919 : f32
    %921 = arith.mulf %885, %899 : f32
    %922 = arith.mulf %886, %902 : f32
    %923 = arith.addf %921, %922 : f32
    %924 = arith.mulf %887, %905 : f32
    %925 = arith.addf %923, %924 : f32
    %926 = arith.mulf %885, %902 : f32
    %927 = arith.mulf %886, %908 : f32
    %928 = arith.addf %926, %927 : f32
    %929 = arith.mulf %887, %911 : f32
    %930 = arith.addf %928, %929 : f32
    %931 = arith.mulf %885, %905 : f32
    %932 = arith.mulf %886, %911 : f32
    %933 = arith.addf %931, %932 : f32
    %934 = arith.mulf %887, %914 : f32
    %935 = arith.addf %933, %934 : f32
    %936 = arith.mulf %886, %899 : f32
    %937 = arith.mulf %888, %902 : f32
    %938 = arith.addf %936, %937 : f32
    %939 = arith.mulf %889, %905 : f32
    %940 = arith.addf %938, %939 : f32
    %941 = arith.mulf %886, %902 : f32
    %942 = arith.mulf %888, %908 : f32
    %943 = arith.addf %941, %942 : f32
    %944 = arith.mulf %889, %911 : f32
    %945 = arith.addf %943, %944 : f32
    %946 = arith.mulf %886, %905 : f32
    %947 = arith.mulf %888, %911 : f32
    %948 = arith.addf %946, %947 : f32
    %949 = arith.mulf %889, %914 : f32
    %950 = arith.addf %948, %949 : f32
    %951 = arith.mulf %887, %899 : f32
    %952 = arith.mulf %889, %902 : f32
    %953 = arith.addf %951, %952 : f32
    %954 = arith.mulf %890, %905 : f32
    %955 = arith.addf %953, %954 : f32
    %956 = arith.mulf %887, %902 : f32
    %957 = arith.mulf %889, %908 : f32
    %958 = arith.addf %956, %957 : f32
    %959 = arith.mulf %890, %911 : f32
    %960 = arith.addf %958, %959 : f32
    %961 = arith.mulf %887, %905 : f32
    %962 = arith.mulf %889, %911 : f32
    %963 = arith.addf %961, %962 : f32
    %964 = arith.mulf %890, %914 : f32
    %965 = arith.addf %963, %964 : f32
    %966 = arith.subf %860, %847 : f32
    %967 = arith.subf %863, %852 : f32
    %968 = arith.subf %866, %857 : f32
    %969 = arith.mulf %925, %966 : f32
    %970 = arith.mulf %930, %967 : f32
    %971 = arith.addf %969, %970 : f32
    %972 = arith.mulf %935, %968 : f32
    %973 = arith.addf %971, %972 : f32
    %974 = arith.mulf %973, %920 : f32
    %975 = arith.addf %847, %974 : f32
    %976 = arith.mulf %940, %966 : f32
    %977 = arith.mulf %945, %967 : f32
    %978 = arith.addf %976, %977 : f32
    %979 = arith.mulf %950, %968 : f32
    %980 = arith.addf %978, %979 : f32
    %981 = arith.mulf %980, %920 : f32
    %982 = arith.addf %852, %981 : f32
    %983 = arith.mulf %955, %966 : f32
    %984 = arith.mulf %960, %967 : f32
    %985 = arith.addf %983, %984 : f32
    %986 = arith.mulf %965, %968 : f32
    %987 = arith.addf %985, %986 : f32
    %988 = arith.mulf %987, %920 : f32
    %989 = arith.addf %857, %988 : f32
    %990 = arith.mulf %925, %885 : f32
    %991 = arith.mulf %930, %886 : f32
    %992 = arith.addf %990, %991 : f32
    %993 = arith.mulf %935, %887 : f32
    %994 = arith.addf %992, %993 : f32
    %995 = arith.mulf %994, %920 : f32
    %996 = arith.subf %885, %995 : f32
    %997 = arith.mulf %925, %886 : f32
    %998 = arith.mulf %930, %888 : f32
    %999 = arith.addf %997, %998 : f32
    %1000 = arith.mulf %935, %889 : f32
    %1001 = arith.addf %999, %1000 : f32
    %1002 = arith.mulf %1001, %920 : f32
    %1003 = arith.subf %886, %1002 : f32
    %1004 = arith.mulf %925, %887 : f32
    %1005 = arith.mulf %930, %889 : f32
    %1006 = arith.addf %1004, %1005 : f32
    %1007 = arith.mulf %935, %890 : f32
    %1008 = arith.addf %1006, %1007 : f32
    %1009 = arith.mulf %1008, %920 : f32
    %1010 = arith.subf %887, %1009 : f32
    %1011 = arith.mulf %940, %886 : f32
    %1012 = arith.mulf %945, %888 : f32
    %1013 = arith.addf %1011, %1012 : f32
    %1014 = arith.mulf %950, %889 : f32
    %1015 = arith.addf %1013, %1014 : f32
    %1016 = arith.mulf %1015, %920 : f32
    %1017 = arith.subf %888, %1016 : f32
    %1018 = arith.mulf %940, %887 : f32
    %1019 = arith.mulf %945, %889 : f32
    %1020 = arith.addf %1018, %1019 : f32
    %1021 = arith.mulf %950, %890 : f32
    %1022 = arith.addf %1020, %1021 : f32
    %1023 = arith.mulf %1022, %920 : f32
    %1024 = arith.subf %889, %1023 : f32
    %1025 = arith.mulf %955, %887 : f32
    %1026 = arith.mulf %960, %889 : f32
    %1027 = arith.addf %1025, %1026 : f32
    %1028 = arith.mulf %965, %890 : f32
    %1029 = arith.addf %1027, %1028 : f32
    %1030 = arith.mulf %1029, %920 : f32
    %1031 = arith.subf %890, %1030 : f32
    %c3_i32_105 = arith.constant 3 : i32
    %1032 = arith.muli %c3_i32_105, %c5_i32_89 : i32
    %c0_i32_106 = arith.constant 0 : i32
    %1033 = arith.addi %1032, %c0_i32_106 : i32
    %1034 = arith.index_cast %1033 : i32 to index
    %1035 = memref.load %arg1[%1034] : memref<24xf32, #tpu.memory_space<smem>>
    memref.store %975, %arg1[%1034] : memref<24xf32, #tpu.memory_space<smem>>
    %c3_i32_107 = arith.constant 3 : i32
    %1036 = arith.muli %c3_i32_107, %c5_i32_89 : i32
    %c1_i32_108 = arith.constant 1 : i32
    %1037 = arith.addi %1036, %c1_i32_108 : i32
    %1038 = arith.index_cast %1037 : i32 to index
    %1039 = memref.load %arg1[%1038] : memref<24xf32, #tpu.memory_space<smem>>
    memref.store %982, %arg1[%1038] : memref<24xf32, #tpu.memory_space<smem>>
    %c3_i32_109 = arith.constant 3 : i32
    %1040 = arith.muli %c3_i32_109, %c5_i32_89 : i32
    %c2_i32_110 = arith.constant 2 : i32
    %1041 = arith.addi %1040, %c2_i32_110 : i32
    %1042 = arith.index_cast %1041 : i32 to index
    %1043 = memref.load %arg1[%1042] : memref<24xf32, #tpu.memory_space<smem>>
    memref.store %989, %arg1[%1042] : memref<24xf32, #tpu.memory_space<smem>>
    %c6_i32_111 = arith.constant 6 : i32
    %c13_i32_112 = arith.constant 13 : i32
    %1044 = arith.muli %c13_i32_112, %c6_i32_111 : i32
    %c6_i32_113 = arith.constant 6 : i32
    %1045 = arith.addi %c6_i32_113, %1044 : i32
    %c0_i32_114 = arith.constant 0 : i32
    %1046 = arith.addi %1045, %c0_i32_114 : i32
    %1047 = arith.index_cast %1046 : i32 to index
    %1048 = memref.load %arg0[%1047] : memref<110xf32, #tpu.memory_space<smem>>
    %1049 = arith.mulf %1048, %1048 : f32
    %c1_i32_115 = arith.constant 1 : i32
    %1050 = arith.addi %1045, %c1_i32_115 : i32
    %1051 = arith.index_cast %1050 : i32 to index
    %1052 = memref.load %arg0[%1051] : memref<110xf32, #tpu.memory_space<smem>>
    %1053 = arith.mulf %1052, %1049 : f32
    %1054 = arith.addf %975, %1053 : f32
    %c2_i32_116 = arith.constant 2 : i32
    %1055 = arith.addi %1045, %c2_i32_116 : i32
    %1056 = arith.index_cast %1055 : i32 to index
    %1057 = memref.load %arg0[%1056] : memref<110xf32, #tpu.memory_space<smem>>
    %1058 = arith.mulf %1057, %1049 : f32
    %1059 = arith.addf %982, %1058 : f32
    %c3_i32_117 = arith.constant 3 : i32
    %1060 = arith.addi %1045, %c3_i32_117 : i32
    %1061 = arith.index_cast %1060 : i32 to index
    %1062 = memref.load %arg0[%1061] : memref<110xf32, #tpu.memory_space<smem>>
    %1063 = arith.mulf %1062, %1049 : f32
    %1064 = arith.addf %989, %1063 : f32
    %c4_i32_118 = arith.constant 4 : i32
    %1065 = arith.addi %1045, %c4_i32_118 : i32
    %1066 = arith.index_cast %1065 : i32 to index
    %1067 = memref.load %arg0[%1066] : memref<110xf32, #tpu.memory_space<smem>>
    %c5_i32_119 = arith.constant 5 : i32
    %1068 = arith.addi %1045, %c5_i32_119 : i32
    %1069 = arith.index_cast %1068 : i32 to index
    %1070 = memref.load %arg0[%1069] : memref<110xf32, #tpu.memory_space<smem>>
    %c6_i32_120 = arith.constant 6 : i32
    %1071 = arith.addi %1045, %c6_i32_120 : i32
    %1072 = arith.index_cast %1071 : i32 to index
    %1073 = memref.load %arg0[%1072] : memref<110xf32, #tpu.memory_space<smem>>
    %c7_i32_121 = arith.constant 7 : i32
    %1074 = arith.addi %1045, %c7_i32_121 : i32
    %1075 = arith.index_cast %1074 : i32 to index
    %1076 = memref.load %arg0[%1075] : memref<110xf32, #tpu.memory_space<smem>>
    %c8_i32_122 = arith.constant 8 : i32
    %1077 = arith.addi %1045, %c8_i32_122 : i32
    %1078 = arith.index_cast %1077 : i32 to index
    %1079 = memref.load %arg0[%1078] : memref<110xf32, #tpu.memory_space<smem>>
    %c9_i32_123 = arith.constant 9 : i32
    %1080 = arith.addi %1045, %c9_i32_123 : i32
    %1081 = arith.index_cast %1080 : i32 to index
    %1082 = memref.load %arg0[%1081] : memref<110xf32, #tpu.memory_space<smem>>
    %c10_i32_124 = arith.constant 10 : i32
    %1083 = arith.addi %1045, %c10_i32_124 : i32
    %1084 = arith.index_cast %1083 : i32 to index
    %1085 = memref.load %arg0[%1084] : memref<110xf32, #tpu.memory_space<smem>>
    %c11_i32_125 = arith.constant 11 : i32
    %1086 = arith.addi %1045, %c11_i32_125 : i32
    %1087 = arith.index_cast %1086 : i32 to index
    %1088 = memref.load %arg0[%1087] : memref<110xf32, #tpu.memory_space<smem>>
    %c12_i32_126 = arith.constant 12 : i32
    %1089 = arith.addi %1045, %c12_i32_126 : i32
    %1090 = arith.index_cast %1089 : i32 to index
    %1091 = memref.load %arg0[%1090] : memref<110xf32, #tpu.memory_space<smem>>
    %1092 = arith.addf %996, %3 : f32
    %1093 = arith.addf %1003, %6 : f32
    %1094 = arith.addf %1010, %7 : f32
    %1095 = arith.addf %1017, %4 : f32
    %1096 = arith.addf %1024, %8 : f32
    %1097 = arith.addf %1031, %5 : f32
    %1098 = arith.addf %1092, %1076 : f32
    %1099 = arith.addf %1093, %1079 : f32
    %1100 = arith.addf %1094, %1082 : f32
    %1101 = arith.addf %1095, %1085 : f32
    %1102 = arith.addf %1096, %1088 : f32
    %1103 = arith.addf %1097, %1091 : f32
    %1104 = arith.mulf %1101, %1103 : f32
    %1105 = arith.mulf %1102, %1102 : f32
    %1106 = arith.subf %1104, %1105 : f32
    %1107 = arith.mulf %1100, %1102 : f32
    %1108 = arith.mulf %1099, %1103 : f32
    %1109 = arith.subf %1107, %1108 : f32
    %1110 = arith.mulf %1099, %1102 : f32
    %1111 = arith.mulf %1100, %1101 : f32
    %1112 = arith.subf %1110, %1111 : f32
    %1113 = arith.mulf %1098, %1103 : f32
    %1114 = arith.mulf %1100, %1100 : f32
    %1115 = arith.subf %1113, %1114 : f32
    %1116 = arith.mulf %1099, %1100 : f32
    %1117 = arith.mulf %1098, %1102 : f32
    %1118 = arith.subf %1116, %1117 : f32
    %1119 = arith.mulf %1098, %1101 : f32
    %1120 = arith.mulf %1099, %1099 : f32
    %1121 = arith.subf %1119, %1120 : f32
    %1122 = arith.mulf %1098, %1106 : f32
    %1123 = arith.mulf %1099, %1109 : f32
    %1124 = arith.addf %1122, %1123 : f32
    %1125 = arith.mulf %1100, %1112 : f32
    %1126 = arith.addf %1124, %1125 : f32
    %1127 = arith.divf %cst_5, %1126 : f32
    %1128 = arith.mulf %1092, %1106 : f32
    %1129 = arith.mulf %1093, %1109 : f32
    %1130 = arith.addf %1128, %1129 : f32
    %1131 = arith.mulf %1094, %1112 : f32
    %1132 = arith.addf %1130, %1131 : f32
    %1133 = arith.mulf %1092, %1109 : f32
    %1134 = arith.mulf %1093, %1115 : f32
    %1135 = arith.addf %1133, %1134 : f32
    %1136 = arith.mulf %1094, %1118 : f32
    %1137 = arith.addf %1135, %1136 : f32
    %1138 = arith.mulf %1092, %1112 : f32
    %1139 = arith.mulf %1093, %1118 : f32
    %1140 = arith.addf %1138, %1139 : f32
    %1141 = arith.mulf %1094, %1121 : f32
    %1142 = arith.addf %1140, %1141 : f32
    %1143 = arith.mulf %1093, %1106 : f32
    %1144 = arith.mulf %1095, %1109 : f32
    %1145 = arith.addf %1143, %1144 : f32
    %1146 = arith.mulf %1096, %1112 : f32
    %1147 = arith.addf %1145, %1146 : f32
    %1148 = arith.mulf %1093, %1109 : f32
    %1149 = arith.mulf %1095, %1115 : f32
    %1150 = arith.addf %1148, %1149 : f32
    %1151 = arith.mulf %1096, %1118 : f32
    %1152 = arith.addf %1150, %1151 : f32
    %1153 = arith.mulf %1093, %1112 : f32
    %1154 = arith.mulf %1095, %1118 : f32
    %1155 = arith.addf %1153, %1154 : f32
    %1156 = arith.mulf %1096, %1121 : f32
    %1157 = arith.addf %1155, %1156 : f32
    %1158 = arith.mulf %1094, %1106 : f32
    %1159 = arith.mulf %1096, %1109 : f32
    %1160 = arith.addf %1158, %1159 : f32
    %1161 = arith.mulf %1097, %1112 : f32
    %1162 = arith.addf %1160, %1161 : f32
    %1163 = arith.mulf %1094, %1109 : f32
    %1164 = arith.mulf %1096, %1115 : f32
    %1165 = arith.addf %1163, %1164 : f32
    %1166 = arith.mulf %1097, %1118 : f32
    %1167 = arith.addf %1165, %1166 : f32
    %1168 = arith.mulf %1094, %1112 : f32
    %1169 = arith.mulf %1096, %1118 : f32
    %1170 = arith.addf %1168, %1169 : f32
    %1171 = arith.mulf %1097, %1121 : f32
    %1172 = arith.addf %1170, %1171 : f32
    %1173 = arith.subf %1067, %1054 : f32
    %1174 = arith.subf %1070, %1059 : f32
    %1175 = arith.subf %1073, %1064 : f32
    %1176 = arith.mulf %1132, %1173 : f32
    %1177 = arith.mulf %1137, %1174 : f32
    %1178 = arith.addf %1176, %1177 : f32
    %1179 = arith.mulf %1142, %1175 : f32
    %1180 = arith.addf %1178, %1179 : f32
    %1181 = arith.mulf %1180, %1127 : f32
    %1182 = arith.addf %1054, %1181 : f32
    %1183 = arith.mulf %1147, %1173 : f32
    %1184 = arith.mulf %1152, %1174 : f32
    %1185 = arith.addf %1183, %1184 : f32
    %1186 = arith.mulf %1157, %1175 : f32
    %1187 = arith.addf %1185, %1186 : f32
    %1188 = arith.mulf %1187, %1127 : f32
    %1189 = arith.addf %1059, %1188 : f32
    %1190 = arith.mulf %1162, %1173 : f32
    %1191 = arith.mulf %1167, %1174 : f32
    %1192 = arith.addf %1190, %1191 : f32
    %1193 = arith.mulf %1172, %1175 : f32
    %1194 = arith.addf %1192, %1193 : f32
    %1195 = arith.mulf %1194, %1127 : f32
    %1196 = arith.addf %1064, %1195 : f32
    %1197 = arith.mulf %1132, %1092 : f32
    %1198 = arith.mulf %1137, %1093 : f32
    %1199 = arith.addf %1197, %1198 : f32
    %1200 = arith.mulf %1142, %1094 : f32
    %1201 = arith.addf %1199, %1200 : f32
    %1202 = arith.mulf %1201, %1127 : f32
    %1203 = arith.subf %1092, %1202 : f32
    %1204 = arith.mulf %1132, %1093 : f32
    %1205 = arith.mulf %1137, %1095 : f32
    %1206 = arith.addf %1204, %1205 : f32
    %1207 = arith.mulf %1142, %1096 : f32
    %1208 = arith.addf %1206, %1207 : f32
    %1209 = arith.mulf %1208, %1127 : f32
    %1210 = arith.subf %1093, %1209 : f32
    %1211 = arith.mulf %1132, %1094 : f32
    %1212 = arith.mulf %1137, %1096 : f32
    %1213 = arith.addf %1211, %1212 : f32
    %1214 = arith.mulf %1142, %1097 : f32
    %1215 = arith.addf %1213, %1214 : f32
    %1216 = arith.mulf %1215, %1127 : f32
    %1217 = arith.subf %1094, %1216 : f32
    %1218 = arith.mulf %1147, %1093 : f32
    %1219 = arith.mulf %1152, %1095 : f32
    %1220 = arith.addf %1218, %1219 : f32
    %1221 = arith.mulf %1157, %1096 : f32
    %1222 = arith.addf %1220, %1221 : f32
    %1223 = arith.mulf %1222, %1127 : f32
    %1224 = arith.subf %1095, %1223 : f32
    %1225 = arith.mulf %1147, %1094 : f32
    %1226 = arith.mulf %1152, %1096 : f32
    %1227 = arith.addf %1225, %1226 : f32
    %1228 = arith.mulf %1157, %1097 : f32
    %1229 = arith.addf %1227, %1228 : f32
    %1230 = arith.mulf %1229, %1127 : f32
    %1231 = arith.subf %1096, %1230 : f32
    %1232 = arith.mulf %1162, %1094 : f32
    %1233 = arith.mulf %1167, %1096 : f32
    %1234 = arith.addf %1232, %1233 : f32
    %1235 = arith.mulf %1172, %1097 : f32
    %1236 = arith.addf %1234, %1235 : f32
    %1237 = arith.mulf %1236, %1127 : f32
    %1238 = arith.subf %1097, %1237 : f32
    %c3_i32_127 = arith.constant 3 : i32
    %1239 = arith.muli %c3_i32_127, %c6_i32_111 : i32
    %c0_i32_128 = arith.constant 0 : i32
    %1240 = arith.addi %1239, %c0_i32_128 : i32
    %1241 = arith.index_cast %1240 : i32 to index
    %1242 = memref.load %arg1[%1241] : memref<24xf32, #tpu.memory_space<smem>>
    memref.store %1182, %arg1[%1241] : memref<24xf32, #tpu.memory_space<smem>>
    %c3_i32_129 = arith.constant 3 : i32
    %1243 = arith.muli %c3_i32_129, %c6_i32_111 : i32
    %c1_i32_130 = arith.constant 1 : i32
    %1244 = arith.addi %1243, %c1_i32_130 : i32
    %1245 = arith.index_cast %1244 : i32 to index
    %1246 = memref.load %arg1[%1245] : memref<24xf32, #tpu.memory_space<smem>>
    memref.store %1189, %arg1[%1245] : memref<24xf32, #tpu.memory_space<smem>>
    %c3_i32_131 = arith.constant 3 : i32
    %1247 = arith.muli %c3_i32_131, %c6_i32_111 : i32
    %c2_i32_132 = arith.constant 2 : i32
    %1248 = arith.addi %1247, %c2_i32_132 : i32
    %1249 = arith.index_cast %1248 : i32 to index
    %1250 = memref.load %arg1[%1249] : memref<24xf32, #tpu.memory_space<smem>>
    memref.store %1196, %arg1[%1249] : memref<24xf32, #tpu.memory_space<smem>>
    %c7_i32_133 = arith.constant 7 : i32
    %c13_i32_134 = arith.constant 13 : i32
    %1251 = arith.muli %c13_i32_134, %c7_i32_133 : i32
    %c6_i32_135 = arith.constant 6 : i32
    %1252 = arith.addi %c6_i32_135, %1251 : i32
    %c0_i32_136 = arith.constant 0 : i32
    %1253 = arith.addi %1252, %c0_i32_136 : i32
    %1254 = arith.index_cast %1253 : i32 to index
    %1255 = memref.load %arg0[%1254] : memref<110xf32, #tpu.memory_space<smem>>
    %1256 = arith.mulf %1255, %1255 : f32
    %c1_i32_137 = arith.constant 1 : i32
    %1257 = arith.addi %1252, %c1_i32_137 : i32
    %1258 = arith.index_cast %1257 : i32 to index
    %1259 = memref.load %arg0[%1258] : memref<110xf32, #tpu.memory_space<smem>>
    %1260 = arith.mulf %1259, %1256 : f32
    %1261 = arith.addf %1182, %1260 : f32
    %c2_i32_138 = arith.constant 2 : i32
    %1262 = arith.addi %1252, %c2_i32_138 : i32
    %1263 = arith.index_cast %1262 : i32 to index
    %1264 = memref.load %arg0[%1263] : memref<110xf32, #tpu.memory_space<smem>>
    %1265 = arith.mulf %1264, %1256 : f32
    %1266 = arith.addf %1189, %1265 : f32
    %c3_i32_139 = arith.constant 3 : i32
    %1267 = arith.addi %1252, %c3_i32_139 : i32
    %1268 = arith.index_cast %1267 : i32 to index
    %1269 = memref.load %arg0[%1268] : memref<110xf32, #tpu.memory_space<smem>>
    %1270 = arith.mulf %1269, %1256 : f32
    %1271 = arith.addf %1196, %1270 : f32
    %c4_i32_140 = arith.constant 4 : i32
    %1272 = arith.addi %1252, %c4_i32_140 : i32
    %1273 = arith.index_cast %1272 : i32 to index
    %1274 = memref.load %arg0[%1273] : memref<110xf32, #tpu.memory_space<smem>>
    %c5_i32_141 = arith.constant 5 : i32
    %1275 = arith.addi %1252, %c5_i32_141 : i32
    %1276 = arith.index_cast %1275 : i32 to index
    %1277 = memref.load %arg0[%1276] : memref<110xf32, #tpu.memory_space<smem>>
    %c6_i32_142 = arith.constant 6 : i32
    %1278 = arith.addi %1252, %c6_i32_142 : i32
    %1279 = arith.index_cast %1278 : i32 to index
    %1280 = memref.load %arg0[%1279] : memref<110xf32, #tpu.memory_space<smem>>
    %c7_i32_143 = arith.constant 7 : i32
    %1281 = arith.addi %1252, %c7_i32_143 : i32
    %1282 = arith.index_cast %1281 : i32 to index
    %1283 = memref.load %arg0[%1282] : memref<110xf32, #tpu.memory_space<smem>>
    %c8_i32_144 = arith.constant 8 : i32
    %1284 = arith.addi %1252, %c8_i32_144 : i32
    %1285 = arith.index_cast %1284 : i32 to index
    %1286 = memref.load %arg0[%1285] : memref<110xf32, #tpu.memory_space<smem>>
    %c9_i32_145 = arith.constant 9 : i32
    %1287 = arith.addi %1252, %c9_i32_145 : i32
    %1288 = arith.index_cast %1287 : i32 to index
    %1289 = memref.load %arg0[%1288] : memref<110xf32, #tpu.memory_space<smem>>
    %c10_i32_146 = arith.constant 10 : i32
    %1290 = arith.addi %1252, %c10_i32_146 : i32
    %1291 = arith.index_cast %1290 : i32 to index
    %1292 = memref.load %arg0[%1291] : memref<110xf32, #tpu.memory_space<smem>>
    %c11_i32_147 = arith.constant 11 : i32
    %1293 = arith.addi %1252, %c11_i32_147 : i32
    %1294 = arith.index_cast %1293 : i32 to index
    %1295 = memref.load %arg0[%1294] : memref<110xf32, #tpu.memory_space<smem>>
    %c12_i32_148 = arith.constant 12 : i32
    %1296 = arith.addi %1252, %c12_i32_148 : i32
    %1297 = arith.index_cast %1296 : i32 to index
    %1298 = memref.load %arg0[%1297] : memref<110xf32, #tpu.memory_space<smem>>
    %1299 = arith.addf %1203, %3 : f32
    %1300 = arith.addf %1210, %6 : f32
    %1301 = arith.addf %1217, %7 : f32
    %1302 = arith.addf %1224, %4 : f32
    %1303 = arith.addf %1231, %8 : f32
    %1304 = arith.addf %1238, %5 : f32
    %1305 = arith.addf %1299, %1283 : f32
    %1306 = arith.addf %1300, %1286 : f32
    %1307 = arith.addf %1301, %1289 : f32
    %1308 = arith.addf %1302, %1292 : f32
    %1309 = arith.addf %1303, %1295 : f32
    %1310 = arith.addf %1304, %1298 : f32
    %1311 = arith.mulf %1308, %1310 : f32
    %1312 = arith.mulf %1309, %1309 : f32
    %1313 = arith.subf %1311, %1312 : f32
    %1314 = arith.mulf %1307, %1309 : f32
    %1315 = arith.mulf %1306, %1310 : f32
    %1316 = arith.subf %1314, %1315 : f32
    %1317 = arith.mulf %1306, %1309 : f32
    %1318 = arith.mulf %1307, %1308 : f32
    %1319 = arith.subf %1317, %1318 : f32
    %1320 = arith.mulf %1305, %1310 : f32
    %1321 = arith.mulf %1307, %1307 : f32
    %1322 = arith.subf %1320, %1321 : f32
    %1323 = arith.mulf %1306, %1307 : f32
    %1324 = arith.mulf %1305, %1309 : f32
    %1325 = arith.subf %1323, %1324 : f32
    %1326 = arith.mulf %1305, %1308 : f32
    %1327 = arith.mulf %1306, %1306 : f32
    %1328 = arith.subf %1326, %1327 : f32
    %1329 = arith.mulf %1305, %1313 : f32
    %1330 = arith.mulf %1306, %1316 : f32
    %1331 = arith.addf %1329, %1330 : f32
    %1332 = arith.mulf %1307, %1319 : f32
    %1333 = arith.addf %1331, %1332 : f32
    %1334 = arith.divf %cst_5, %1333 : f32
    %1335 = arith.mulf %1299, %1313 : f32
    %1336 = arith.mulf %1300, %1316 : f32
    %1337 = arith.addf %1335, %1336 : f32
    %1338 = arith.mulf %1301, %1319 : f32
    %1339 = arith.addf %1337, %1338 : f32
    %1340 = arith.mulf %1299, %1316 : f32
    %1341 = arith.mulf %1300, %1322 : f32
    %1342 = arith.addf %1340, %1341 : f32
    %1343 = arith.mulf %1301, %1325 : f32
    %1344 = arith.addf %1342, %1343 : f32
    %1345 = arith.mulf %1299, %1319 : f32
    %1346 = arith.mulf %1300, %1325 : f32
    %1347 = arith.addf %1345, %1346 : f32
    %1348 = arith.mulf %1301, %1328 : f32
    %1349 = arith.addf %1347, %1348 : f32
    %1350 = arith.mulf %1300, %1313 : f32
    %1351 = arith.mulf %1302, %1316 : f32
    %1352 = arith.addf %1350, %1351 : f32
    %1353 = arith.mulf %1303, %1319 : f32
    %1354 = arith.addf %1352, %1353 : f32
    %1355 = arith.mulf %1300, %1316 : f32
    %1356 = arith.mulf %1302, %1322 : f32
    %1357 = arith.addf %1355, %1356 : f32
    %1358 = arith.mulf %1303, %1325 : f32
    %1359 = arith.addf %1357, %1358 : f32
    %1360 = arith.mulf %1300, %1319 : f32
    %1361 = arith.mulf %1302, %1325 : f32
    %1362 = arith.addf %1360, %1361 : f32
    %1363 = arith.mulf %1303, %1328 : f32
    %1364 = arith.addf %1362, %1363 : f32
    %1365 = arith.mulf %1301, %1313 : f32
    %1366 = arith.mulf %1303, %1316 : f32
    %1367 = arith.addf %1365, %1366 : f32
    %1368 = arith.mulf %1304, %1319 : f32
    %1369 = arith.addf %1367, %1368 : f32
    %1370 = arith.mulf %1301, %1316 : f32
    %1371 = arith.mulf %1303, %1322 : f32
    %1372 = arith.addf %1370, %1371 : f32
    %1373 = arith.mulf %1304, %1325 : f32
    %1374 = arith.addf %1372, %1373 : f32
    %1375 = arith.mulf %1301, %1319 : f32
    %1376 = arith.mulf %1303, %1325 : f32
    %1377 = arith.addf %1375, %1376 : f32
    %1378 = arith.mulf %1304, %1328 : f32
    %1379 = arith.addf %1377, %1378 : f32
    %1380 = arith.subf %1274, %1261 : f32
    %1381 = arith.subf %1277, %1266 : f32
    %1382 = arith.subf %1280, %1271 : f32
    %1383 = arith.mulf %1339, %1380 : f32
    %1384 = arith.mulf %1344, %1381 : f32
    %1385 = arith.addf %1383, %1384 : f32
    %1386 = arith.mulf %1349, %1382 : f32
    %1387 = arith.addf %1385, %1386 : f32
    %1388 = arith.mulf %1387, %1334 : f32
    %1389 = arith.addf %1261, %1388 : f32
    %1390 = arith.mulf %1354, %1380 : f32
    %1391 = arith.mulf %1359, %1381 : f32
    %1392 = arith.addf %1390, %1391 : f32
    %1393 = arith.mulf %1364, %1382 : f32
    %1394 = arith.addf %1392, %1393 : f32
    %1395 = arith.mulf %1394, %1334 : f32
    %1396 = arith.addf %1266, %1395 : f32
    %1397 = arith.mulf %1369, %1380 : f32
    %1398 = arith.mulf %1374, %1381 : f32
    %1399 = arith.addf %1397, %1398 : f32
    %1400 = arith.mulf %1379, %1382 : f32
    %1401 = arith.addf %1399, %1400 : f32
    %1402 = arith.mulf %1401, %1334 : f32
    %1403 = arith.addf %1271, %1402 : f32
    %1404 = arith.mulf %1339, %1299 : f32
    %1405 = arith.mulf %1344, %1300 : f32
    %1406 = arith.addf %1404, %1405 : f32
    %1407 = arith.mulf %1349, %1301 : f32
    %1408 = arith.addf %1406, %1407 : f32
    %1409 = arith.mulf %1408, %1334 : f32
    %1410 = arith.subf %1299, %1409 : f32
    %1411 = arith.mulf %1339, %1300 : f32
    %1412 = arith.mulf %1344, %1302 : f32
    %1413 = arith.addf %1411, %1412 : f32
    %1414 = arith.mulf %1349, %1303 : f32
    %1415 = arith.addf %1413, %1414 : f32
    %1416 = arith.mulf %1415, %1334 : f32
    %1417 = arith.subf %1300, %1416 : f32
    %1418 = arith.mulf %1339, %1301 : f32
    %1419 = arith.mulf %1344, %1303 : f32
    %1420 = arith.addf %1418, %1419 : f32
    %1421 = arith.mulf %1349, %1304 : f32
    %1422 = arith.addf %1420, %1421 : f32
    %1423 = arith.mulf %1422, %1334 : f32
    %1424 = arith.subf %1301, %1423 : f32
    %1425 = arith.mulf %1354, %1300 : f32
    %1426 = arith.mulf %1359, %1302 : f32
    %1427 = arith.addf %1425, %1426 : f32
    %1428 = arith.mulf %1364, %1303 : f32
    %1429 = arith.addf %1427, %1428 : f32
    %1430 = arith.mulf %1429, %1334 : f32
    %1431 = arith.subf %1302, %1430 : f32
    %1432 = arith.mulf %1354, %1301 : f32
    %1433 = arith.mulf %1359, %1303 : f32
    %1434 = arith.addf %1432, %1433 : f32
    %1435 = arith.mulf %1364, %1304 : f32
    %1436 = arith.addf %1434, %1435 : f32
    %1437 = arith.mulf %1436, %1334 : f32
    %1438 = arith.subf %1303, %1437 : f32
    %1439 = arith.mulf %1369, %1301 : f32
    %1440 = arith.mulf %1374, %1303 : f32
    %1441 = arith.addf %1439, %1440 : f32
    %1442 = arith.mulf %1379, %1304 : f32
    %1443 = arith.addf %1441, %1442 : f32
    %1444 = arith.mulf %1443, %1334 : f32
    %1445 = arith.subf %1304, %1444 : f32
    %c3_i32_149 = arith.constant 3 : i32
    %1446 = arith.muli %c3_i32_149, %c7_i32_133 : i32
    %c0_i32_150 = arith.constant 0 : i32
    %1447 = arith.addi %1446, %c0_i32_150 : i32
    %1448 = arith.index_cast %1447 : i32 to index
    %1449 = memref.load %arg1[%1448] : memref<24xf32, #tpu.memory_space<smem>>
    memref.store %1389, %arg1[%1448] : memref<24xf32, #tpu.memory_space<smem>>
    %c3_i32_151 = arith.constant 3 : i32
    %1450 = arith.muli %c3_i32_151, %c7_i32_133 : i32
    %c1_i32_152 = arith.constant 1 : i32
    %1451 = arith.addi %1450, %c1_i32_152 : i32
    %1452 = arith.index_cast %1451 : i32 to index
    %1453 = memref.load %arg1[%1452] : memref<24xf32, #tpu.memory_space<smem>>
    memref.store %1396, %arg1[%1452] : memref<24xf32, #tpu.memory_space<smem>>
    %c3_i32_153 = arith.constant 3 : i32
    %1454 = arith.muli %c3_i32_153, %c7_i32_133 : i32
    %c2_i32_154 = arith.constant 2 : i32
    %1455 = arith.addi %1454, %c2_i32_154 : i32
    %1456 = arith.index_cast %1455 : i32 to index
    %1457 = memref.load %arg1[%1456] : memref<24xf32, #tpu.memory_space<smem>>
    memref.store %1403, %arg1[%1456] : memref<24xf32, #tpu.memory_space<smem>>
    %c7_i32_155 = arith.constant 7 : i32
    return
  }
}

</mosaic_0001>

<llo_original>
// kernel: tpu_custom_call.1
$region0: #{tpu_custom_call.1}
  #allocation0 [shape = 'u32[]', space=smem, size = 0x4, offset = 0x4, fixed_abs, tag = 'smem constant byte address 0x4 - core index']
  #allocation1 [shape = 'u32[144,128]{1,0:T(1,128)}', space=vmem, size = 0x12000, scoped, tag = 'internal scratch']
  %s0 = inlined_call_operand.hbm [shape: f32[110], index: 0, kind: input, shape index: {}]
  %s1 = inlined_call_operand.hbm [shape: f32[24], index: 1, kind: output, shape index: {}]
  %s2 = sld [smem:[#allocation0]]
  $region18: #{tpu_custom_call.1} parent=0
    _
  %s4 = ssub.s32 1, %s2
  %s5 = scalar_select 0, %s4, %s2
  $region1: #{tpu_custom_call.1} parent=0
    #allocation2 [shape = 'u8[512]{0}', space=smem, size = 0x200, scoped, tag = 'input window, operand 0, single buffered']
    #allocation3 [shape = 's32[1]{0}', space=sflag, size = 0x4, scoped, tag = 'scoped memory for tpu_custom_call.1']
    #allocation4 [shape = 's32[1]{0}', space=sflag, size = 0x4, scoped, tag = 'scoped memory for tpu_custom_call.1']
    #allocation5 [shape = 'u8[512]{0}', space=smem, size = 0x200, scoped, tag = 'output window, operand 0, single buffered']
    %6 = vsyncpa [#allocation3], 0
    %7 = vsyncpa [#allocation4], 0
    // Predicated region
    $region2: #{tpu_custom_call.1} parent=1 // pred_check
      _
    $region3: #{tpu_custom_call.1} parent=1 // pred_check_branch
      %9 = sbr.rel (0) target = $region5
    $region4: #{tpu_custom_call.1} parent=1 // pred_region
      %s11 = ssub.s32 16, 16
      %12 = vsyncadd [#allocation3], %s11
      %15 = dma.hbm_to_smem %s0, 16, [#allocation2], [#allocation3]
    $region5: #{tpu_custom_call.1} parent=1 // pred_fallthru
      _
    // Predicated region
    $region6: #{tpu_custom_call.1} parent=1 // pred_check
      _
    $region7: #{tpu_custom_call.1} parent=1 // pred_check_branch
      %17 = sbr.rel (0) target = $region9
    $region8: #{tpu_custom_call.1} parent=1 // pred_region
      %18 = dma.done [#allocation3], 16
    $region9: #{tpu_custom_call.1} parent=1 // pred_fallthru
      _
    %19 = sfence
    %s20 = scalar_lea.smem [#allocation5], 0
    %21 = sst [smem:[%s20]] 0.0
    %s22 = scalar_lea.smem [#allocation5], 1
    %23 = sst [smem:[%s22]] 0.0
    %s24 = scalar_lea.smem [#allocation5], 2
    %25 = sst [smem:[%s24]] 0.0
    %s26 = sld [smem:[#allocation2]]
    %s27 = sld [smem:[#allocation2 + $0x1]]
    %s28 = sld [smem:[#allocation2 + $0x2]]
    %s29 = sld [smem:[#allocation2 + $0x3]]
    %s30 = sld [smem:[#allocation2 + $0x4]]
    %s31 = sld [smem:[#allocation2 + $0x5]]
    %s32 = sld [smem:[#allocation2 + $0x13]]
    %s33 = smul.f32 %s32, %s32
    %s34 = sld [smem:[#allocation2 + $0x14]]
    %s35 = smul.f32 %s34, %s33
    %s36 = sadd.f32 %s35, 0.0
    %s37 = sld [smem:[#allocation2 + $0x15]]
    %s38 = smul.f32 %s37, %s33
    %s39 = sadd.f32 %s38, 0.0
    %s40 = sld [smem:[#allocation2 + $0x16]]
    %s41 = smul.f32 %s40, %s33
    %s42 = sadd.f32 %s41, 0.0
    %s43 = sld [smem:[#allocation2 + $0x17]]
    %s44 = sld [smem:[#allocation2 + $0x18]]
    %s45 = sld [smem:[#allocation2 + $0x19]]
    %s46 = sld [smem:[#allocation2 + $0x1a]]
    %s47 = sld [smem:[#allocation2 + $0x1b]]
    %s48 = sld [smem:[#allocation2 + $0x1c]]
    %s49 = sld [smem:[#allocation2 + $0x1d]]
    %s50 = sld [smem:[#allocation2 + $0x1e]]
    %s51 = sld [smem:[#allocation2 + $0x1f]]
    %s52 = sadd.f32 %s26, 0.0
    %s53 = sadd.f32 %s29, 0.0
    %s54 = sadd.f32 %s30, 0.0
    %s55 = sadd.f32 %s27, 0.0
    %s56 = sadd.f32 %s31, 0.0
    %s57 = sadd.f32 %s28, 0.0
    %s58 = sadd.f32 %s52, %s46
    %s59 = sadd.f32 %s53, %s47
    %s60 = sadd.f32 %s54, %s48
    %s61 = sadd.f32 %s55, %s49
    %s62 = sadd.f32 %s56, %s50
    %s63 = sadd.f32 %s57, %s51
    %s64 = smul.f32 %s61, %s63
    %s65 = smul.f32 %s62, %s62
    %s66 = ssub.f32 %s64, %s65
    %s67 = smul.f32 %s60, %s62
    %s68 = smul.f32 %s59, %s63
    %s69 = ssub.f32 %s67, %s68
    %s70 = smul.f32 %s59, %s62
    %s71 = smul.f32 %s60, %s61
    %s72 = ssub.f32 %s70, %s71
    %s73 = smul.f32 %s58, %s63
    %s74 = smul.f32 %s60, %s60
    %s75 = ssub.f32 %s73, %s74
    %s76 = smul.f32 %s59, %s60
    %s77 = smul.f32 %s58, %s62
    %s78 = ssub.f32 %s76, %s77
    %s79 = smul.f32 %s58, %s61
    %s80 = smul.f32 %s59, %s59
    %s81 = ssub.f32 %s79, %s80
    %s82 = smul.f32 %s58, %s66
    %s83 = smul.f32 %s59, %s69
    %s84 = sadd.f32 %s82, %s83
    %s85 = smul.f32 %s60, %s72
    %s86 = sadd.f32 %s84, %s85
    %v87 = vstv %s86
    %v88 = vrcp.pop %v87
    %s89 = vtos %v88
    %s90 = smul.f32 %s52, %s66
    %s91 = smul.f32 %s53, %s69
    %s92 = sadd.f32 %s90, %s91
    %s93 = smul.f32 %s54, %s72
    %s94 = sadd.f32 %s92, %s93
    %s95 = smul.f32 %s52, %s69
    %s96 = smul.f32 %s53, %s75
    %s97 = sadd.f32 %s95, %s96
    %s98 = smul.f32 %s54, %s78
    %s99 = sadd.f32 %s97, %s98
    %s100 = smul.f32 %s52, %s72
    %s101 = smul.f32 %s53, %s78
    %s102 = sadd.f32 %s100, %s101
    %s103 = smul.f32 %s54, %s81
    %s104 = sadd.f32 %s102, %s103
    %s105 = smul.f32 %s53, %s66
    %s106 = smul.f32 %s55, %s69
    %s107 = sadd.f32 %s105, %s106
    %s108 = smul.f32 %s56, %s72
    %s109 = sadd.f32 %s107, %s108
    %s110 = smul.f32 %s55, %s75
    %s111 = sadd.f32 %s91, %s110
    %s112 = smul.f32 %s56, %s78
    %s113 = sadd.f32 %s111, %s112
    %s114 = smul.f32 %s53, %s72
    %s115 = smul.f32 %s55, %s78
    %s116 = sadd.f32 %s114, %s115
    %s117 = smul.f32 %s56, %s81
    %s118 = sadd.f32 %s116, %s117
    %s119 = smul.f32 %s54, %s66
    %s120 = smul.f32 %s56, %s69
    %s121 = sadd.f32 %s119, %s120
    %s122 = smul.f32 %s57, %s72
    %s123 = sadd.f32 %s121, %s122
    %s124 = smul.f32 %s54, %s69
    %s125 = smul.f32 %s56, %s75
    %s126 = sadd.f32 %s124, %s125
    %s127 = smul.f32 %s57, %s78
    %s128 = sadd.f32 %s126, %s127
    %s129 = sadd.f32 %s93, %s112
    %s130 = smul.f32 %s57, %s81
    %s131 = sadd.f32 %s129, %s130
    %s132 = ssub.f32 %s43, %s36
    %s133 = ssub.f32 %s44, %s39
    %s134 = ssub.f32 %s45, %s42
    %s135 = smul.f32 %s94, %s132
    %s136 = smul.f32 %s99, %s133
    %s137 = sadd.f32 %s135, %s136
    %s138 = smul.f32 %s104, %s134
    %s139 = sadd.f32 %s137, %s138
    %s140 = smul.f32 %s139, %s89
    %s141 = sadd.f32 %s36, %s140
    %s142 = smul.f32 %s109, %s132
    %s143 = smul.f32 %s113, %s133
    %s144 = sadd.f32 %s142, %s143
    %s145 = smul.f32 %s118, %s134
    %s146 = sadd.f32 %s144, %s145
    %s147 = smul.f32 %s146, %s89
    %s148 = sadd.f32 %s39, %s147
    %s149 = smul.f32 %s123, %s132
    %s150 = smul.f32 %s128, %s133
    %s151 = sadd.f32 %s149, %s150
    %s152 = smul.f32 %s131, %s134
    %s153 = sadd.f32 %s151, %s152
    %s154 = smul.f32 %s153, %s89
    %s155 = sadd.f32 %s42, %s154
    %s156 = smul.f32 %s94, %s52
    %s157 = smul.f32 %s99, %s53
    %s158 = sadd.f32 %s156, %s157
    %s159 = smul.f32 %s104, %s54
    %s160 = sadd.f32 %s158, %s159
    %s161 = smul.f32 %s160, %s89
    %s162 = ssub.f32 %s52, %s161
    %s163 = smul.f32 %s94, %s53
    %s164 = smul.f32 %s99, %s55
    %s165 = sadd.f32 %s163, %s164
    %s166 = smul.f32 %s104, %s56
    %s167 = sadd.f32 %s165, %s166
    %s168 = smul.f32 %s167, %s89
    %s169 = ssub.f32 %s53, %s168
    %s170 = smul.f32 %s94, %s54
    %s171 = smul.f32 %s99, %s56
    %s172 = sadd.f32 %s170, %s171
    %s173 = smul.f32 %s104, %s57
    %s174 = sadd.f32 %s172, %s173
    %s175 = smul.f32 %s174, %s89
    %s176 = ssub.f32 %s54, %s175
    %s177 = smul.f32 %s109, %s53
    %s178 = smul.f32 %s113, %s55
    %s179 = sadd.f32 %s177, %s178
    %s180 = smul.f32 %s118, %s56
    %s181 = sadd.f32 %s179, %s180
    %s182 = smul.f32 %s181, %s89
    %s183 = ssub.f32 %s55, %s182
    %s184 = smul.f32 %s109, %s54
    %s185 = smul.f32 %s113, %s56
    %s186 = sadd.f32 %s184, %s185
    %s187 = smul.f32 %s118, %s57
    %s188 = sadd.f32 %s186, %s187
    %s189 = smul.f32 %s188, %s89
    %s190 = ssub.f32 %s56, %s189
    %s191 = smul.f32 %s123, %s54
    %s192 = smul.f32 %s128, %s56
    %s193 = sadd.f32 %s191, %s192
    %s194 = smul.f32 %s131, %s57
    %s195 = sadd.f32 %s193, %s194
    %s196 = smul.f32 %s195, %s89
    %s197 = ssub.f32 %s57, %s196
    %s198 = scalar_lea.smem [#allocation5], 3
    %199 = sst [smem:[%s198]] %s141
    %s200 = scalar_lea.smem [#allocation5], 4
    %201 = sst [smem:[%s200]] %s148
    %s202 = scalar_lea.smem [#allocation5], 5
    %203 = sst [smem:[%s202]] %s155
    %s204 = sld [smem:[#allocation2 + $0x20]]
    %s205 = smul.f32 %s204, %s204
    %s206 = sld [smem:[#allocation2 + $0x21]]
    %s207 = smul.f32 %s206, %s205
    %s208 = sadd.f32 %s141, %s207
    %s209 = sld [smem:[#allocation2 + $0x22]]
    %s210 = smul.f32 %s209, %s205
    %s211 = sadd.f32 %s148, %s210
    %s212 = sld [smem:[#allocation2 + $0x23]]
    %s213 = smul.f32 %s212, %s205
    %s214 = sadd.f32 %s155, %s213
    %s215 = sld [smem:[#allocation2 + $0x24]]
    %s216 = sld [smem:[#allocation2 + $0x25]]
    %s217 = sld [smem:[#allocation2 + $0x26]]
    %s218 = sld [smem:[#allocation2 + $0x27]]
    %s219 = sld [smem:[#allocation2 + $0x28]]
    %s220 = sld [smem:[#allocation2 + $0x29]]
    %s221 = sld [smem:[#allocation2 + $0x2a]]
    %s222 = sld [smem:[#allocation2 + $0x2b]]
    %s223 = sld [smem:[#allocation2 + $0x2c]]
    %s224 = sadd.f32 %s162, %s26
    %s225 = sadd.f32 %s169, %s29
    %s226 = sadd.f32 %s176, %s30
    %s227 = sadd.f32 %s183, %s27
    %s228 = sadd.f32 %s190, %s31
    %s229 = sadd.f32 %s197, %s28
    %s230 = sadd.f32 %s224, %s218
    %s231 = sadd.f32 %s225, %s219
    %s232 = sadd.f32 %s226, %s220
    %s233 = sadd.f32 %s227, %s221
    %s234 = sadd.f32 %s228, %s222
    %s235 = sadd.f32 %s229, %s223
    %s236 = smul.f32 %s233, %s235
    %s237 = smul.f32 %s234, %s234
    %s238 = ssub.f32 %s236, %s237
    %s239 = smul.f32 %s232, %s234
    %s240 = smul.f32 %s231, %s235
    %s241 = ssub.f32 %s239, %s240
    %s242 = smul.f32 %s231, %s234
    %s243 = smul.f32 %s232, %s233
    %s244 = ssub.f32 %s242, %s243
    %s245 = smul.f32 %s230, %s235
    %s246 = smul.f32 %s232, %s232
    %s247 = ssub.f32 %s245, %s246
    %s248 = smul.f32 %s231, %s232
    %s249 = smul.f32 %s230, %s234
    %s250 = ssub.f32 %s248, %s249
    %s251 = smul.f32 %s230, %s233
    %s252 = smul.f32 %s231, %s231
    %s253 = ssub.f32 %s251, %s252
    %s254 = smul.f32 %s230, %s238
    %s255 = smul.f32 %s231, %s241
    %s256 = sadd.f32 %s254, %s255
    %s257 = smul.f32 %s232, %s244
    %s258 = sadd.f32 %s256, %s257
    %v259 = vstv %s258
    %v260 = vrcp.pop %v259
    %s261 = vtos %v260
    %s262 = smul.f32 %s224, %s238
    %s263 = smul.f32 %s225, %s241
    %s264 = sadd.f32 %s262, %s263
    %s265 = smul.f32 %s226, %s244
    %s266 = sadd.f32 %s264, %s265
    %s267 = smul.f32 %s224, %s241
    %s268 = smul.f32 %s225, %s247
    %s269 = sadd.f32 %s267, %s268
    %s270 = smul.f32 %s226, %s250
    %s271 = sadd.f32 %s269, %s270
    %s272 = smul.f32 %s224, %s244
    %s273 = smul.f32 %s225, %s250
    %s274 = sadd.f32 %s272, %s273
    %s275 = smul.f32 %s226, %s253
    %s276 = sadd.f32 %s274, %s275
    %s277 = smul.f32 %s225, %s238
    %s278 = smul.f32 %s227, %s241
    %s279 = sadd.f32 %s277, %s278
    %s280 = smul.f32 %s228, %s244
    %s281 = sadd.f32 %s279, %s280
    %s282 = smul.f32 %s227, %s247
    %s283 = sadd.f32 %s263, %s282
    %s284 = smul.f32 %s228, %s250
    %s285 = sadd.f32 %s283, %s284
    %s286 = smul.f32 %s225, %s244
    %s287 = smul.f32 %s227, %s250
    %s288 = sadd.f32 %s286, %s287
    %s289 = smul.f32 %s228, %s253
    %s290 = sadd.f32 %s288, %s289
    %s291 = smul.f32 %s226, %s238
    %s292 = smul.f32 %s228, %s241
    %s293 = sadd.f32 %s291, %s292
    %s294 = smul.f32 %s229, %s244
    %s295 = sadd.f32 %s293, %s294
    %s296 = smul.f32 %s226, %s241
    %s297 = smul.f32 %s228, %s247
    %s298 = sadd.f32 %s296, %s297
    %s299 = smul.f32 %s229, %s250
    %s300 = sadd.f32 %s298, %s299
    %s301 = sadd.f32 %s265, %s284
    %s302 = smul.f32 %s229, %s253
    %s303 = sadd.f32 %s301, %s302
    %s304 = ssub.f32 %s215, %s208
    %s305 = ssub.f32 %s216, %s211
    %s306 = ssub.f32 %s217, %s214
    %s307 = smul.f32 %s266, %s304
    %s308 = smul.f32 %s271, %s305
    %s309 = sadd.f32 %s307, %s308
    %s310 = smul.f32 %s276, %s306
    %s311 = sadd.f32 %s309, %s310
    %s312 = smul.f32 %s311, %s261
    %s313 = sadd.f32 %s208, %s312
    %s314 = smul.f32 %s281, %s304
    %s315 = smul.f32 %s285, %s305
    %s316 = sadd.f32 %s314, %s315
    %s317 = smul.f32 %s290, %s306
    %s318 = sadd.f32 %s316, %s317
    %s319 = smul.f32 %s318, %s261
    %s320 = sadd.f32 %s211, %s319
    %s321 = smul.f32 %s295, %s304
    %s322 = smul.f32 %s300, %s305
    %s323 = sadd.f32 %s321, %s322
    %s324 = smul.f32 %s303, %s306
    %s325 = sadd.f32 %s323, %s324
    %s326 = smul.f32 %s325, %s261
    %s327 = sadd.f32 %s214, %s326
    %s328 = smul.f32 %s266, %s224
    %s329 = smul.f32 %s271, %s225
    %s330 = sadd.f32 %s328, %s329
    %s331 = smul.f32 %s276, %s226
    %s332 = sadd.f32 %s330, %s331
    %s333 = smul.f32 %s332, %s261
    %s334 = ssub.f32 %s224, %s333
    %s335 = smul.f32 %s266, %s225
    %s336 = smul.f32 %s271, %s227
    %s337 = sadd.f32 %s335, %s336
    %s338 = smul.f32 %s276, %s228
    %s339 = sadd.f32 %s337, %s338
    %s340 = smul.f32 %s339, %s261
    %s341 = ssub.f32 %s225, %s340
    %s342 = smul.f32 %s266, %s226
    %s343 = smul.f32 %s271, %s228
    %s344 = sadd.f32 %s342, %s343
    %s345 = smul.f32 %s276, %s229
    %s346 = sadd.f32 %s344, %s345
    %s347 = smul.f32 %s346, %s261
    %s348 = ssub.f32 %s226, %s347
    %s349 = smul.f32 %s281, %s225
    %s350 = smul.f32 %s285, %s227
    %s351 = sadd.f32 %s349, %s350
    %s352 = smul.f32 %s290, %s228
    %s353 = sadd.f32 %s351, %s352
    %s354 = smul.f32 %s353, %s261
    %s355 = ssub.f32 %s227, %s354
    %s356 = smul.f32 %s281, %s226
    %s357 = smul.f32 %s285, %s228
    %s358 = sadd.f32 %s356, %s357
    %s359 = smul.f32 %s290, %s229
    %s360 = sadd.f32 %s358, %s359
    %s361 = smul.f32 %s360, %s261
    %s362 = ssub.f32 %s228, %s361
    %s363 = smul.f32 %s295, %s226
    %s364 = smul.f32 %s300, %s228
    %s365 = sadd.f32 %s363, %s364
    %s366 = smul.f32 %s303, %s229
    %s367 = sadd.f32 %s365, %s366
    %s368 = smul.f32 %s367, %s261
    %s369 = ssub.f32 %s229, %s368
    %s370 = scalar_lea.smem [#allocation5], 6
    %371 = sst [smem:[%s370]] %s313
    %s372 = scalar_lea.smem [#allocation5], 7
    %373 = sst [smem:[%s372]] %s320
    %s374 = scalar_lea.smem [#allocation5], 8
    %375 = sst [smem:[%s374]] %s327
    %s376 = sld [smem:[#allocation2 + $0x2d]]
    %s377 = smul.f32 %s376, %s376
    %s378 = sld [smem:[#allocation2 + $0x2e]]
    %s379 = smul.f32 %s378, %s377
    %s380 = sadd.f32 %s313, %s379
    %s381 = sld [smem:[#allocation2 + $0x2f]]
    %s382 = smul.f32 %s381, %s377
    %s383 = sadd.f32 %s320, %s382
    %s384 = sld [smem:[#allocation2 + $0x30]]
    %s385 = smul.f32 %s384, %s377
    %s386 = sadd.f32 %s327, %s385
    %s387 = sld [smem:[#allocation2 + $0x31]]
    %s388 = sld [smem:[#allocation2 + $0x32]]
    %s389 = sld [smem:[#allocation2 + $0x33]]
    %s390 = sld [smem:[#allocation2 + $0x34]]
    %s391 = sld [smem:[#allocation2 + $0x35]]
    %s392 = sld [smem:[#allocation2 + $0x36]]
    %s393 = sld [smem:[#allocation2 + $0x37]]
    %s394 = sld [smem:[#allocation2 + $0x38]]
    %s395 = sld [smem:[#allocation2 + $0x39]]
    %s396 = sadd.f32 %s334, %s26
    %s397 = sadd.f32 %s341, %s29
    %s398 = sadd.f32 %s348, %s30
    %s399 = sadd.f32 %s355, %s27
    %s400 = sadd.f32 %s362, %s31
    %s401 = sadd.f32 %s369, %s28
    %s402 = sadd.f32 %s396, %s390
    %s403 = sadd.f32 %s397, %s391
    %s404 = sadd.f32 %s398, %s392
    %s405 = sadd.f32 %s399, %s393
    %s406 = sadd.f32 %s400, %s394
    %s407 = sadd.f32 %s401, %s395
    %s408 = smul.f32 %s405, %s407
    %s409 = smul.f32 %s406, %s406
    %s410 = ssub.f32 %s408, %s409
    %s411 = smul.f32 %s404, %s406
    %s412 = smul.f32 %s403, %s407
    %s413 = ssub.f32 %s411, %s412
    %s414 = smul.f32 %s403, %s406
    %s415 = smul.f32 %s404, %s405
    %s416 = ssub.f32 %s414, %s415
    %s417 = smul.f32 %s402, %s407
    %s418 = smul.f32 %s404, %s404
    %s419 = ssub.f32 %s417, %s418
    %s420 = smul.f32 %s403, %s404
    %s421 = smul.f32 %s402, %s406
    %s422 = ssub.f32 %s420, %s421
    %s423 = smul.f32 %s402, %s405
    %s424 = smul.f32 %s403, %s403
    %s425 = ssub.f32 %s423, %s424
    %s426 = smul.f32 %s402, %s410
    %s427 = smul.f32 %s403, %s413
    %s428 = sadd.f32 %s426, %s427
    %s429 = smul.f32 %s404, %s416
    %s430 = sadd.f32 %s428, %s429
    %v431 = vstv %s430
    %v432 = vrcp.pop %v431
    %s433 = vtos %v432
    %s434 = smul.f32 %s396, %s410
    %s435 = smul.f32 %s397, %s413
    %s436 = sadd.f32 %s434, %s435
    %s437 = smul.f32 %s398, %s416
    %s438 = sadd.f32 %s436, %s437
    %s439 = smul.f32 %s396, %s413
    %s440 = smul.f32 %s397, %s419
    %s441 = sadd.f32 %s439, %s440
    %s442 = smul.f32 %s398, %s422
    %s443 = sadd.f32 %s441, %s442
    %s444 = smul.f32 %s396, %s416
    %s445 = smul.f32 %s397, %s422
    %s446 = sadd.f32 %s444, %s445
    %s447 = smul.f32 %s398, %s425
    %s448 = sadd.f32 %s446, %s447
    %s449 = smul.f32 %s397, %s410
    %s450 = smul.f32 %s399, %s413
    %s451 = sadd.f32 %s449, %s450
    %s452 = smul.f32 %s400, %s416
    %s453 = sadd.f32 %s451, %s452
    %s454 = smul.f32 %s399, %s419
    %s455 = sadd.f32 %s435, %s454
    %s456 = smul.f32 %s400, %s422
    %s457 = sadd.f32 %s455, %s456
    %s458 = smul.f32 %s397, %s416
    %s459 = smul.f32 %s399, %s422
    %s460 = sadd.f32 %s458, %s459
    %s461 = smul.f32 %s400, %s425
    %s462 = sadd.f32 %s460, %s461
    %s463 = smul.f32 %s398, %s410
    %s464 = smul.f32 %s400, %s413
    %s465 = sadd.f32 %s463, %s464
    %s466 = smul.f32 %s401, %s416
    %s467 = sadd.f32 %s465, %s466
    %s468 = smul.f32 %s398, %s413
    %s469 = smul.f32 %s400, %s419
    %s470 = sadd.f32 %s468, %s469
    %s471 = smul.f32 %s401, %s422
    %s472 = sadd.f32 %s470, %s471
    %s473 = sadd.f32 %s437, %s456
    %s474 = smul.f32 %s401, %s425
    %s475 = sadd.f32 %s473, %s474
    %s476 = ssub.f32 %s387, %s380
    %s477 = ssub.f32 %s388, %s383
    %s478 = ssub.f32 %s389, %s386
    %s479 = smul.f32 %s438, %s476
    %s480 = smul.f32 %s443, %s477
    %s481 = sadd.f32 %s479, %s480
    %s482 = smul.f32 %s448, %s478
    %s483 = sadd.f32 %s481, %s482
    %s484 = smul.f32 %s483, %s433
    %s485 = sadd.f32 %s380, %s484
    %s486 = smul.f32 %s453, %s476
    %s487 = smul.f32 %s457, %s477
    %s488 = sadd.f32 %s486, %s487
    %s489 = smul.f32 %s462, %s478
    %s490 = sadd.f32 %s488, %s489
    %s491 = smul.f32 %s490, %s433
    %s492 = sadd.f32 %s383, %s491
    %s493 = smul.f32 %s467, %s476
    %s494 = smul.f32 %s472, %s477
    %s495 = sadd.f32 %s493, %s494
    %s496 = smul.f32 %s475, %s478
    %s497 = sadd.f32 %s495, %s496
    %s498 = smul.f32 %s497, %s433
    %s499 = sadd.f32 %s386, %s498
    %s500 = smul.f32 %s438, %s396
    %s501 = smul.f32 %s443, %s397
    %s502 = sadd.f32 %s500, %s501
    %s503 = smul.f32 %s448, %s398
    %s504 = sadd.f32 %s502, %s503
    %s505 = smul.f32 %s504, %s433
    %s506 = ssub.f32 %s396, %s505
    %s507 = smul.f32 %s438, %s397
    %s508 = smul.f32 %s443, %s399
    %s509 = sadd.f32 %s507, %s508
    %s510 = smul.f32 %s448, %s400
    %s511 = sadd.f32 %s509, %s510
    %s512 = smul.f32 %s511, %s433
    %s513 = ssub.f32 %s397, %s512
    %s514 = smul.f32 %s438, %s398
    %s515 = smul.f32 %s443, %s400
    %s516 = sadd.f32 %s514, %s515
    %s517 = smul.f32 %s448, %s401
    %s518 = sadd.f32 %s516, %s517
    %s519 = smul.f32 %s518, %s433
    %s520 = ssub.f32 %s398, %s519
    %s521 = smul.f32 %s453, %s397
    %s522 = smul.f32 %s457, %s399
    %s523 = sadd.f32 %s521, %s522
    %s524 = smul.f32 %s462, %s400
    %s525 = sadd.f32 %s523, %s524
    %s526 = smul.f32 %s525, %s433
    %s527 = ssub.f32 %s399, %s526
    %s528 = smul.f32 %s453, %s398
    %s529 = smul.f32 %s457, %s400
    %s530 = sadd.f32 %s528, %s529
    %s531 = smul.f32 %s462, %s401
    %s532 = sadd.f32 %s530, %s531
    %s533 = smul.f32 %s532, %s433
    %s534 = ssub.f32 %s400, %s533
    %s535 = smul.f32 %s467, %s398
    %s536 = smul.f32 %s472, %s400
    %s537 = sadd.f32 %s535, %s536
    %s538 = smul.f32 %s475, %s401
    %s539 = sadd.f32 %s537, %s538
    %s540 = smul.f32 %s539, %s433
    %s541 = ssub.f32 %s401, %s540
    %s542 = scalar_lea.smem [#allocation5], 9
    %543 = sst [smem:[%s542]] %s485
    %s544 = scalar_lea.smem [#allocation5], 10
    %545 = sst [smem:[%s544]] %s492
    %s546 = scalar_lea.smem [#allocation5], 11
    %547 = sst [smem:[%s546]] %s499
    %s548 = sld [smem:[#allocation2 + $0x3a]]
    %s549 = smul.f32 %s548, %s548
    %s550 = sld [smem:[#allocation2 + $0x3b]]
    %s551 = smul.f32 %s550, %s549
    %s552 = sadd.f32 %s485, %s551
    %s553 = sld [smem:[#allocation2 + $0x3c]]
    %s554 = smul.f32 %s553, %s549
    %s555 = sadd.f32 %s492, %s554
    %s556 = sld [smem:[#allocation2 + $0x3d]]
    %s557 = smul.f32 %s556, %s549
    %s558 = sadd.f32 %s499, %s557
    %s559 = sld [smem:[#allocation2 + $0x3e]]
    %s560 = sld [smem:[#allocation2 + $0x3f]]
    %s561 = sld [smem:[#allocation2 + $0x40]]
    %s562 = sld [smem:[#allocation2 + $0x41]]
    %s563 = sld [smem:[#allocation2 + $0x42]]
    %s564 = sld [smem:[#allocation2 + $0x43]]
    %s565 = sld [smem:[#allocation2 + $0x44]]
    %s566 = sld [smem:[#allocation2 + $0x45]]
    %s567 = sld [smem:[#allocation2 + $0x46]]
    %s568 = sadd.f32 %s506, %s26
    %s569 = sadd.f32 %s513, %s29
    %s570 = sadd.f32 %s520, %s30
    %s571 = sadd.f32 %s527, %s27
    %s572 = sadd.f32 %s534, %s31
    %s573 = sadd.f32 %s541, %s28
    %s574 = sadd.f32 %s568, %s562
    %s575 = sadd.f32 %s569, %s563
    %s576 = sadd.f32 %s570, %s564
    %s577 = sadd.f32 %s571, %s565
    %s578 = sadd.f32 %s572, %s566
    %s579 = sadd.f32 %s573, %s567
    %s580 = smul.f32 %s577, %s579
    %s581 = smul.f32 %s578, %s578
    %s582 = ssub.f32 %s580, %s581
    %s583 = smul.f32 %s576, %s578
    %s584 = smul.f32 %s575, %s579
    %s585 = ssub.f32 %s583, %s584
    %s586 = smul.f32 %s575, %s578
    %s587 = smul.f32 %s576, %s577
    %s588 = ssub.f32 %s586, %s587
    %s589 = smul.f32 %s574, %s579
    %s590 = smul.f32 %s576, %s576
    %s591 = ssub.f32 %s589, %s590
    %s592 = smul.f32 %s575, %s576
    %s593 = smul.f32 %s574, %s578
    %s594 = ssub.f32 %s592, %s593
    %s595 = smul.f32 %s574, %s577
    %s596 = smul.f32 %s575, %s575
    %s597 = ssub.f32 %s595, %s596
    %s598 = smul.f32 %s574, %s582
    %s599 = smul.f32 %s575, %s585
    %s600 = sadd.f32 %s598, %s599
    %s601 = smul.f32 %s576, %s588
    %s602 = sadd.f32 %s600, %s601
    %v603 = vstv %s602
    %v604 = vrcp.pop %v603
    %s605 = vtos %v604
    %s606 = smul.f32 %s568, %s582
    %s607 = smul.f32 %s569, %s585
    %s608 = sadd.f32 %s606, %s607
    %s609 = smul.f32 %s570, %s588
    %s610 = sadd.f32 %s608, %s609
    %s611 = smul.f32 %s568, %s585
    %s612 = smul.f32 %s569, %s591
    %s613 = sadd.f32 %s611, %s612
    %s614 = smul.f32 %s570, %s594
    %s615 = sadd.f32 %s613, %s614
    %s616 = smul.f32 %s568, %s588
    %s617 = smul.f32 %s569, %s594
    %s618 = sadd.f32 %s616, %s617
    %s619 = smul.f32 %s570, %s597
    %s620 = sadd.f32 %s618, %s619
    %s621 = smul.f32 %s569, %s582
    %s622 = smul.f32 %s571, %s585
    %s623 = sadd.f32 %s621, %s622
    %s624 = smul.f32 %s572, %s588
    %s625 = sadd.f32 %s623, %s624
    %s626 = smul.f32 %s571, %s591
    %s627 = sadd.f32 %s607, %s626
    %s628 = smul.f32 %s572, %s594
    %s629 = sadd.f32 %s627, %s628
    %s630 = smul.f32 %s569, %s588
    %s631 = smul.f32 %s571, %s594
    %s632 = sadd.f32 %s630, %s631
    %s633 = smul.f32 %s572, %s597
    %s634 = sadd.f32 %s632, %s633
    %s635 = smul.f32 %s570, %s582
    %s636 = smul.f32 %s572, %s585
    %s637 = sadd.f32 %s635, %s636
    %s638 = smul.f32 %s573, %s588
    %s639 = sadd.f32 %s637, %s638
    %s640 = smul.f32 %s570, %s585
    %s641 = smul.f32 %s572, %s591
    %s642 = sadd.f32 %s640, %s641
    %s643 = smul.f32 %s573, %s594
    %s644 = sadd.f32 %s642, %s643
    %s645 = sadd.f32 %s609, %s628
    %s646 = smul.f32 %s573, %s597
    %s647 = sadd.f32 %s645, %s646
    %s648 = ssub.f32 %s559, %s552
    %s649 = ssub.f32 %s560, %s555
    %s650 = ssub.f32 %s561, %s558
    %s651 = smul.f32 %s610, %s648
    %s652 = smul.f32 %s615, %s649
    %s653 = sadd.f32 %s651, %s652
    %s654 = smul.f32 %s620, %s650
    %s655 = sadd.f32 %s653, %s654
    %s656 = smul.f32 %s655, %s605
    %s657 = sadd.f32 %s552, %s656
    %s658 = smul.f32 %s625, %s648
    %s659 = smul.f32 %s629, %s649
    %s660 = sadd.f32 %s658, %s659
    %s661 = smul.f32 %s634, %s650
    %s662 = sadd.f32 %s660, %s661
    %s663 = smul.f32 %s662, %s605
    %s664 = sadd.f32 %s555, %s663
    %s665 = smul.f32 %s639, %s648
    %s666 = smul.f32 %s644, %s649
    %s667 = sadd.f32 %s665, %s666
    %s668 = smul.f32 %s647, %s650
    %s669 = sadd.f32 %s667, %s668
    %s670 = smul.f32 %s669, %s605
    %s671 = sadd.f32 %s558, %s670
    %s672 = smul.f32 %s610, %s568
    %s673 = smul.f32 %s615, %s569
    %s674 = sadd.f32 %s672, %s673
    %s675 = smul.f32 %s620, %s570
    %s676 = sadd.f32 %s674, %s675
    %s677 = smul.f32 %s676, %s605
    %s678 = ssub.f32 %s568, %s677
    %s679 = smul.f32 %s610, %s569
    %s680 = smul.f32 %s615, %s571
    %s681 = sadd.f32 %s679, %s680
    %s682 = smul.f32 %s620, %s572
    %s683 = sadd.f32 %s681, %s682
    %s684 = smul.f32 %s683, %s605
    %s685 = ssub.f32 %s569, %s684
    %s686 = smul.f32 %s610, %s570
    %s687 = smul.f32 %s615, %s572
    %s688 = sadd.f32 %s686, %s687
    %s689 = smul.f32 %s620, %s573
    %s690 = sadd.f32 %s688, %s689
    %s691 = smul.f32 %s690, %s605
    %s692 = ssub.f32 %s570, %s691
    %s693 = smul.f32 %s625, %s569
    %s694 = smul.f32 %s629, %s571
    %s695 = sadd.f32 %s693, %s694
    %s696 = smul.f32 %s634, %s572
    %s697 = sadd.f32 %s695, %s696
    %s698 = smul.f32 %s697, %s605
    %s699 = ssub.f32 %s571, %s698
    %s700 = smul.f32 %s625, %s570
    %s701 = smul.f32 %s629, %s572
    %s702 = sadd.f32 %s700, %s701
    %s703 = smul.f32 %s634, %s573
    %s704 = sadd.f32 %s702, %s703
    %s705 = smul.f32 %s704, %s605
    %s706 = ssub.f32 %s572, %s705
    %s707 = smul.f32 %s639, %s570
    %s708 = smul.f32 %s644, %s572
    %s709 = sadd.f32 %s707, %s708
    %s710 = smul.f32 %s647, %s573
    %s711 = sadd.f32 %s709, %s710
    %s712 = smul.f32 %s711, %s605
    %s713 = ssub.f32 %s573, %s712
    %s714 = scalar_lea.smem [#allocation5], 12
    %715 = sst [smem:[%s714]] %s657
    %s716 = scalar_lea.smem [#allocation5], 13
    %717 = sst [smem:[%s716]] %s664
    %s718 = scalar_lea.smem [#allocation5], 14
    %719 = sst [smem:[%s718]] %s671
    %s720 = sld [smem:[#allocation2 + $0x47]]
    %s721 = smul.f32 %s720, %s720
    %s722 = sld [smem:[#allocation2 + $0x48]]
    %s723 = smul.f32 %s722, %s721
    %s724 = sadd.f32 %s657, %s723
    %s725 = sld [smem:[#allocation2 + $0x49]]
    %s726 = smul.f32 %s725, %s721
    %s727 = sadd.f32 %s664, %s726
    %s728 = sld [smem:[#allocation2 + $0x4a]]
    %s729 = smul.f32 %s728, %s721
    %s730 = sadd.f32 %s671, %s729
    %s731 = sld [smem:[#allocation2 + $0x4b]]
    %s732 = sld [smem:[#allocation2 + $0x4c]]
    %s733 = sld [smem:[#allocation2 + $0x4d]]
    %s734 = sld [smem:[#allocation2 + $0x4e]]
    %s735 = sld [smem:[#allocation2 + $0x4f]]
    %s736 = sld [smem:[#allocation2 + $0x50]]
    %s737 = sld [smem:[#allocation2 + $0x51]]
    %s738 = sld [smem:[#allocation2 + $0x52]]
    %s739 = sld [smem:[#allocation2 + $0x53]]
    %s740 = sadd.f32 %s678, %s26
    %s741 = sadd.f32 %s685, %s29
    %s742 = sadd.f32 %s692, %s30
    %s743 = sadd.f32 %s699, %s27
    %s744 = sadd.f32 %s706, %s31
    %s745 = sadd.f32 %s713, %s28
    %s746 = sadd.f32 %s740, %s734
    %s747 = sadd.f32 %s741, %s735
    %s748 = sadd.f32 %s742, %s736
    %s749 = sadd.f32 %s743, %s737
    %s750 = sadd.f32 %s744, %s738
    %s751 = sadd.f32 %s745, %s739
    %s752 = smul.f32 %s749, %s751
    %s753 = smul.f32 %s750, %s750
    %s754 = ssub.f32 %s752, %s753
    %s755 = smul.f32 %s748, %s750
    %s756 = smul.f32 %s747, %s751
    %s757 = ssub.f32 %s755, %s756
    %s758 = smul.f32 %s747, %s750
    %s759 = smul.f32 %s748, %s749
    %s760 = ssub.f32 %s758, %s759
    %s761 = smul.f32 %s746, %s751
    %s762 = smul.f32 %s748, %s748
    %s763 = ssub.f32 %s761, %s762
    %s764 = smul.f32 %s747, %s748
    %s765 = smul.f32 %s746, %s750
    %s766 = ssub.f32 %s764, %s765
    %s767 = smul.f32 %s746, %s749
    %s768 = smul.f32 %s747, %s747
    %s769 = ssub.f32 %s767, %s768
    %s770 = smul.f32 %s746, %s754
    %s771 = smul.f32 %s747, %s757
    %s772 = sadd.f32 %s770, %s771
    %s773 = smul.f32 %s748, %s760
    %s774 = sadd.f32 %s772, %s773
    %v775 = vstv %s774
    %v776 = vrcp.pop %v775
    %s777 = vtos %v776
    %s778 = smul.f32 %s740, %s754
    %s779 = smul.f32 %s741, %s757
    %s780 = sadd.f32 %s778, %s779
    %s781 = smul.f32 %s742, %s760
    %s782 = sadd.f32 %s780, %s781
    %s783 = smul.f32 %s740, %s757
    %s784 = smul.f32 %s741, %s763
    %s785 = sadd.f32 %s783, %s784
    %s786 = smul.f32 %s742, %s766
    %s787 = sadd.f32 %s785, %s786
    %s788 = smul.f32 %s740, %s760
    %s789 = smul.f32 %s741, %s766
    %s790 = sadd.f32 %s788, %s789
    %s791 = smul.f32 %s742, %s769
    %s792 = sadd.f32 %s790, %s791
    %s793 = smul.f32 %s741, %s754
    %s794 = smul.f32 %s743, %s757
    %s795 = sadd.f32 %s793, %s794
    %s796 = smul.f32 %s744, %s760
    %s797 = sadd.f32 %s795, %s796
    %s798 = smul.f32 %s743, %s763
    %s799 = sadd.f32 %s779, %s798
    %s800 = smul.f32 %s744, %s766
    %s801 = sadd.f32 %s799, %s800
    %s802 = smul.f32 %s741, %s760
    %s803 = smul.f32 %s743, %s766
    %s804 = sadd.f32 %s802, %s803
    %s805 = smul.f32 %s744, %s769
    %s806 = sadd.f32 %s804, %s805
    %s807 = smul.f32 %s742, %s754
    %s808 = smul.f32 %s744, %s757
    %s809 = sadd.f32 %s807, %s808
    %s810 = smul.f32 %s745, %s760
    %s811 = sadd.f32 %s809, %s810
    %s812 = smul.f32 %s742, %s757
    %s813 = smul.f32 %s744, %s763
    %s814 = sadd.f32 %s812, %s813
    %s815 = smul.f32 %s745, %s766
    %s816 = sadd.f32 %s814, %s815
    %s817 = sadd.f32 %s781, %s800
    %s818 = smul.f32 %s745, %s769
    %s819 = sadd.f32 %s817, %s818
    %s820 = ssub.f32 %s731, %s724
    %s821 = ssub.f32 %s732, %s727
    %s822 = ssub.f32 %s733, %s730
    %s823 = smul.f32 %s782, %s820
    %s824 = smul.f32 %s787, %s821
    %s825 = sadd.f32 %s823, %s824
    %s826 = smul.f32 %s792, %s822
    %s827 = sadd.f32 %s825, %s826
    %s828 = smul.f32 %s827, %s777
    %s829 = sadd.f32 %s724, %s828
    %s830 = smul.f32 %s797, %s820
    %s831 = smul.f32 %s801, %s821
    %s832 = sadd.f32 %s830, %s831
    %s833 = smul.f32 %s806, %s822
    %s834 = sadd.f32 %s832, %s833
    %s835 = smul.f32 %s834, %s777
    %s836 = sadd.f32 %s727, %s835
    %s837 = smul.f32 %s811, %s820
    %s838 = smul.f32 %s816, %s821
    %s839 = sadd.f32 %s837, %s838
    %s840 = smul.f32 %s819, %s822
    %s841 = sadd.f32 %s839, %s840
    %s842 = smul.f32 %s841, %s777
    %s843 = sadd.f32 %s730, %s842
    %s844 = smul.f32 %s782, %s740
    %s845 = smul.f32 %s787, %s741
    %s846 = sadd.f32 %s844, %s845
    %s847 = smul.f32 %s792, %s742
    %s848 = sadd.f32 %s846, %s847
    %s849 = smul.f32 %s848, %s777
    %s850 = ssub.f32 %s740, %s849
    %s851 = smul.f32 %s782, %s741
    %s852 = smul.f32 %s787, %s743
    %s853 = sadd.f32 %s851, %s852
    %s854 = smul.f32 %s792, %s744
    %s855 = sadd.f32 %s853, %s854
    %s856 = smul.f32 %s855, %s777
    %s857 = ssub.f32 %s741, %s856
    %s858 = smul.f32 %s782, %s742
    %s859 = smul.f32 %s787, %s744
    %s860 = sadd.f32 %s858, %s859
    %s861 = smul.f32 %s792, %s745
    %s862 = sadd.f32 %s860, %s861
    %s863 = smul.f32 %s862, %s777
    %s864 = ssub.f32 %s742, %s863
    %s865 = smul.f32 %s797, %s741
    %s866 = smul.f32 %s801, %s743
    %s867 = sadd.f32 %s865, %s866
    %s868 = smul.f32 %s806, %s744
    %s869 = sadd.f32 %s867, %s868
    %s870 = smul.f32 %s869, %s777
    %s871 = ssub.f32 %s743, %s870
    %s872 = smul.f32 %s797, %s742
    %s873 = smul.f32 %s801, %s744
    %s874 = sadd.f32 %s872, %s873
    %s875 = smul.f32 %s806, %s745
    %s876 = sadd.f32 %s874, %s875
    %s877 = smul.f32 %s876, %s777
    %s878 = ssub.f32 %s744, %s877
    %s879 = smul.f32 %s811, %s742
    %s880 = smul.f32 %s816, %s744
    %s881 = sadd.f32 %s879, %s880
    %s882 = smul.f32 %s819, %s745
    %s883 = sadd.f32 %s881, %s882
    %s884 = smul.f32 %s883, %s777
    %s885 = ssub.f32 %s745, %s884
    %s886 = scalar_lea.smem [#allocation5], 15
    %887 = sst [smem:[%s886]] %s829
    %s888 = scalar_lea.smem [#allocation5], 16
    %889 = sst [smem:[%s888]] %s836
    %s890 = scalar_lea.smem [#allocation5], 17
    %891 = sst [smem:[%s890]] %s843
    %s892 = sld [smem:[#allocation2 + $0x54]]
    %s893 = smul.f32 %s892, %s892
    %s894 = sld [smem:[#allocation2 + $0x55]]
    %s895 = smul.f32 %s894, %s893
    %s896 = sadd.f32 %s829, %s895
    %s897 = sld [smem:[#allocation2 + $0x56]]
    %s898 = smul.f32 %s897, %s893
    %s899 = sadd.f32 %s836, %s898
    %s900 = sld [smem:[#allocation2 + $0x57]]
    %s901 = smul.f32 %s900, %s893
    %s902 = sadd.f32 %s843, %s901
    %s903 = sld [smem:[#allocation2 + $0x58]]
    %s904 = sld [smem:[#allocation2 + $0x59]]
    %s905 = sld [smem:[#allocation2 + $0x5a]]
    %s906 = sld [smem:[#allocation2 + $0x5b]]
    %s907 = sld [smem:[#allocation2 + $0x5c]]
    %s908 = sld [smem:[#allocation2 + $0x5d]]
    %s909 = sld [smem:[#allocation2 + $0x5e]]
    %s910 = sld [smem:[#allocation2 + $0x5f]]
    %s911 = sld [smem:[#allocation2 + $0x60]]
    %s912 = sadd.f32 %s850, %s26
    %s913 = sadd.f32 %s857, %s29
    %s914 = sadd.f32 %s864, %s30
    %s915 = sadd.f32 %s871, %s27
    %s916 = sadd.f32 %s878, %s31
    %s917 = sadd.f32 %s885, %s28
    %s918 = sadd.f32 %s912, %s906
    %s919 = sadd.f32 %s913, %s907
    %s920 = sadd.f32 %s914, %s908
    %s921 = sadd.f32 %s915, %s909
    %s922 = sadd.f32 %s916, %s910
    %s923 = sadd.f32 %s917, %s911
    %s924 = smul.f32 %s921, %s923
    %s925 = smul.f32 %s922, %s922
    %s926 = ssub.f32 %s924, %s925
    %s927 = smul.f32 %s920, %s922
    %s928 = smul.f32 %s919, %s923
    %s929 = ssub.f32 %s927, %s928
    %s930 = smul.f32 %s919, %s922
    %s931 = smul.f32 %s920, %s921
    %s932 = ssub.f32 %s930, %s931
    %s933 = smul.f32 %s918, %s923
    %s934 = smul.f32 %s920, %s920
    %s935 = ssub.f32 %s933, %s934
    %s936 = smul.f32 %s919, %s920
    %s937 = smul.f32 %s918, %s922
    %s938 = ssub.f32 %s936, %s937
    %s939 = smul.f32 %s918, %s921
    %s940 = smul.f32 %s919, %s919
    %s941 = ssub.f32 %s939, %s940
    %s942 = smul.f32 %s918, %s926
    %s943 = smul.f32 %s919, %s929
    %s944 = sadd.f32 %s942, %s943
    %s945 = smul.f32 %s920, %s932
    %s946 = sadd.f32 %s944, %s945
    %v947 = vstv %s946
    %v948 = vrcp.pop %v947
    %s949 = vtos %v948
    %s950 = smul.f32 %s912, %s926
    %s951 = smul.f32 %s913, %s929
    %s952 = sadd.f32 %s950, %s951
    %s953 = smul.f32 %s914, %s932
    %s954 = sadd.f32 %s952, %s953
    %s955 = smul.f32 %s912, %s929
    %s956 = smul.f32 %s913, %s935
    %s957 = sadd.f32 %s955, %s956
    %s958 = smul.f32 %s914, %s938
    %s959 = sadd.f32 %s957, %s958
    %s960 = smul.f32 %s912, %s932
    %s961 = smul.f32 %s913, %s938
    %s962 = sadd.f32 %s960, %s961
    %s963 = smul.f32 %s914, %s941
    %s964 = sadd.f32 %s962, %s963
    %s965 = smul.f32 %s913, %s926
    %s966 = smul.f32 %s915, %s929
    %s967 = sadd.f32 %s965, %s966
    %s968 = smul.f32 %s916, %s932
    %s969 = sadd.f32 %s967, %s968
    %s970 = smul.f32 %s915, %s935
    %s971 = sadd.f32 %s951, %s970
    %s972 = smul.f32 %s916, %s938
    %s973 = sadd.f32 %s971, %s972
    %s974 = smul.f32 %s913, %s932
    %s975 = smul.f32 %s915, %s938
    %s976 = sadd.f32 %s974, %s975
    %s977 = smul.f32 %s916, %s941
    %s978 = sadd.f32 %s976, %s977
    %s979 = smul.f32 %s914, %s926
    %s980 = smul.f32 %s916, %s929
    %s981 = sadd.f32 %s979, %s980
    %s982 = smul.f32 %s917, %s932
    %s983 = sadd.f32 %s981, %s982
    %s984 = smul.f32 %s914, %s929
    %s985 = smul.f32 %s916, %s935
    %s986 = sadd.f32 %s984, %s985
    %s987 = smul.f32 %s917, %s938
    %s988 = sadd.f32 %s986, %s987
    %s989 = sadd.f32 %s953, %s972
    %s990 = smul.f32 %s917, %s941
    %s991 = sadd.f32 %s989, %s990
    %s992 = ssub.f32 %s903, %s896
    %s993 = ssub.f32 %s904, %s899
    %s994 = ssub.f32 %s905, %s902
    %s995 = smul.f32 %s954, %s992
    %s996 = smul.f32 %s959, %s993
    %s997 = sadd.f32 %s995, %s996
    %s998 = smul.f32 %s964, %s994
    %s999 = sadd.f32 %s997, %s998
    %s1000 = smul.f32 %s999, %s949
    %s1001 = sadd.f32 %s896, %s1000
    %s1002 = smul.f32 %s969, %s992
    %s1003 = smul.f32 %s973, %s993
    %s1004 = sadd.f32 %s1002, %s1003
    %s1005 = smul.f32 %s978, %s994
    %s1006 = sadd.f32 %s1004, %s1005
    %s1007 = smul.f32 %s1006, %s949
    %s1008 = sadd.f32 %s899, %s1007
    %s1009 = smul.f32 %s983, %s992
    %s1010 = smul.f32 %s988, %s993
    %s1011 = sadd.f32 %s1009, %s1010
    %s1012 = smul.f32 %s991, %s994
    %s1013 = sadd.f32 %s1011, %s1012
    %s1014 = smul.f32 %s1013, %s949
    %s1015 = sadd.f32 %s902, %s1014
    %s1016 = smul.f32 %s954, %s912
    %s1017 = smul.f32 %s959, %s913
    %s1018 = sadd.f32 %s1016, %s1017
    %s1019 = smul.f32 %s964, %s914
    %s1020 = sadd.f32 %s1018, %s1019
    %s1021 = smul.f32 %s1020, %s949
    %s1022 = ssub.f32 %s912, %s1021
    %s1023 = smul.f32 %s954, %s913
    %s1024 = smul.f32 %s959, %s915
    %s1025 = sadd.f32 %s1023, %s1024
    %s1026 = smul.f32 %s964, %s916
    %s1027 = sadd.f32 %s1025, %s1026
    %s1028 = smul.f32 %s1027, %s949
    %s1029 = ssub.f32 %s913, %s1028
    %s1030 = smul.f32 %s954, %s914
    %s1031 = smul.f32 %s959, %s916
    %s1032 = sadd.f32 %s1030, %s1031
    %s1033 = smul.f32 %s964, %s917
    %s1034 = sadd.f32 %s1032, %s1033
    %s1035 = smul.f32 %s1034, %s949
    %s1036 = ssub.f32 %s914, %s1035
    %s1037 = smul.f32 %s969, %s913
    %s1038 = smul.f32 %s973, %s915
    %s1039 = sadd.f32 %s1037, %s1038
    %s1040 = smul.f32 %s978, %s916
    %s1041 = sadd.f32 %s1039, %s1040
    %s1042 = smul.f32 %s1041, %s949
    %s1043 = ssub.f32 %s915, %s1042
    %s1044 = smul.f32 %s969, %s914
    %s1045 = smul.f32 %s973, %s916
    %s1046 = sadd.f32 %s1044, %s1045
    %s1047 = smul.f32 %s978, %s917
    %s1048 = sadd.f32 %s1046, %s1047
    %s1049 = smul.f32 %s1048, %s949
    %s1050 = ssub.f32 %s916, %s1049
    %s1051 = smul.f32 %s983, %s914
    %s1052 = smul.f32 %s988, %s916
    %s1053 = sadd.f32 %s1051, %s1052
    %s1054 = smul.f32 %s991, %s917
    %s1055 = sadd.f32 %s1053, %s1054
    %s1056 = smul.f32 %s1055, %s949
    %s1057 = ssub.f32 %s917, %s1056
    %s1058 = scalar_lea.smem [#allocation5], 18
    %1059 = sst [smem:[%s1058]] %s1001
    %s1060 = scalar_lea.smem [#allocation5], 19
    %1061 = sst [smem:[%s1060]] %s1008
    %s1062 = scalar_lea.smem [#allocation5], 20
    %1063 = sst [smem:[%s1062]] %s1015
    %s1064 = sld [smem:[#allocation2 + $0x61]]
    %s1065 = smul.f32 %s1064, %s1064
    %s1066 = sld [smem:[#allocation2 + $0x62]]
    %s1067 = smul.f32 %s1066, %s1065
    %s1068 = sadd.f32 %s1001, %s1067
    %s1069 = sld [smem:[#allocation2 + $0x63]]
    %s1070 = smul.f32 %s1069, %s1065
    %s1071 = sadd.f32 %s1008, %s1070
    %s1072 = sld [smem:[#allocation2 + $0x64]]
    %s1073 = smul.f32 %s1072, %s1065
    %s1074 = sadd.f32 %s1015, %s1073
    %s1075 = sld [smem:[#allocation2 + $0x65]]
    %s1076 = sld [smem:[#allocation2 + $0x66]]
    %s1077 = sld [smem:[#allocation2 + $0x67]]
    %s1078 = sld [smem:[#allocation2 + $0x68]]
    %s1079 = sld [smem:[#allocation2 + $0x69]]
    %s1080 = sld [smem:[#allocation2 + $0x6a]]
    %s1081 = sld [smem:[#allocation2 + $0x6b]]
    %s1082 = sld [smem:[#allocation2 + $0x6c]]
    %s1083 = sld [smem:[#allocation2 + $0x6d]]
    %s1084 = sadd.f32 %s1022, %s26
    %s1085 = sadd.f32 %s1029, %s29
    %s1086 = sadd.f32 %s1036, %s30
    %s1087 = sadd.f32 %s1043, %s27
    %s1088 = sadd.f32 %s1050, %s31
    %s1089 = sadd.f32 %s1057, %s28
    %s1090 = sadd.f32 %s1084, %s1078
    %s1091 = sadd.f32 %s1085, %s1079
    %s1092 = sadd.f32 %s1086, %s1080
    %s1093 = sadd.f32 %s1087, %s1081
    %s1094 = sadd.f32 %s1088, %s1082
    %s1095 = sadd.f32 %s1089, %s1083
    %s1096 = smul.f32 %s1093, %s1095
    %s1097 = smul.f32 %s1094, %s1094
    %s1098 = ssub.f32 %s1096, %s1097
    %s1099 = smul.f32 %s1092, %s1094
    %s1100 = smul.f32 %s1091, %s1095
    %s1101 = ssub.f32 %s1099, %s1100
    %s1102 = smul.f32 %s1091, %s1094
    %s1103 = smul.f32 %s1092, %s1093
    %s1104 = ssub.f32 %s1102, %s1103
    %s1105 = smul.f32 %s1090, %s1095
    %s1106 = smul.f32 %s1092, %s1092
    %s1107 = ssub.f32 %s1105, %s1106
    %s1108 = smul.f32 %s1091, %s1092
    %s1109 = smul.f32 %s1090, %s1094
    %s1110 = ssub.f32 %s1108, %s1109
    %s1111 = smul.f32 %s1090, %s1093
    %s1112 = smul.f32 %s1091, %s1091
    %s1113 = ssub.f32 %s1111, %s1112
    %s1114 = smul.f32 %s1090, %s1098
    %s1115 = smul.f32 %s1091, %s1101
    %s1116 = sadd.f32 %s1114, %s1115
    %s1117 = smul.f32 %s1092, %s1104
    %s1118 = sadd.f32 %s1116, %s1117
    %v1119 = vstv %s1118
    %v1120 = vrcp.pop %v1119
    %s1121 = vtos %v1120
    %s1122 = smul.f32 %s1084, %s1098
    %s1123 = smul.f32 %s1085, %s1101
    %s1124 = sadd.f32 %s1122, %s1123
    %s1125 = smul.f32 %s1086, %s1104
    %s1126 = sadd.f32 %s1124, %s1125
    %s1127 = smul.f32 %s1084, %s1101
    %s1128 = smul.f32 %s1085, %s1107
    %s1129 = sadd.f32 %s1127, %s1128
    %s1130 = smul.f32 %s1086, %s1110
    %s1131 = sadd.f32 %s1129, %s1130
    %s1132 = smul.f32 %s1084, %s1104
    %s1133 = smul.f32 %s1085, %s1110
    %s1134 = sadd.f32 %s1132, %s1133
    %s1135 = smul.f32 %s1086, %s1113
    %s1136 = sadd.f32 %s1134, %s1135
    %s1137 = smul.f32 %s1085, %s1098
    %s1138 = smul.f32 %s1087, %s1101
    %s1139 = sadd.f32 %s1137, %s1138
    %s1140 = smul.f32 %s1088, %s1104
    %s1141 = sadd.f32 %s1139, %s1140
    %s1142 = smul.f32 %s1087, %s1107
    %s1143 = sadd.f32 %s1123, %s1142
    %s1144 = smul.f32 %s1088, %s1110
    %s1145 = sadd.f32 %s1143, %s1144
    %s1146 = smul.f32 %s1085, %s1104
    %s1147 = smul.f32 %s1087, %s1110
    %s1148 = sadd.f32 %s1146, %s1147
    %s1149 = smul.f32 %s1088, %s1113
    %s1150 = sadd.f32 %s1148, %s1149
    %s1151 = smul.f32 %s1086, %s1098
    %s1152 = smul.f32 %s1088, %s1101
    %s1153 = sadd.f32 %s1151, %s1152
    %s1154 = smul.f32 %s1089, %s1104
    %s1155 = sadd.f32 %s1153, %s1154
    %s1156 = smul.f32 %s1086, %s1101
    %s1157 = smul.f32 %s1088, %s1107
    %s1158 = sadd.f32 %s1156, %s1157
    %s1159 = smul.f32 %s1089, %s1110
    %s1160 = sadd.f32 %s1158, %s1159
    %s1161 = sadd.f32 %s1125, %s1144
    %s1162 = smul.f32 %s1089, %s1113
    %s1163 = sadd.f32 %s1161, %s1162
    %s1164 = ssub.f32 %s1075, %s1068
    %s1165 = ssub.f32 %s1076, %s1071
    %s1166 = ssub.f32 %s1077, %s1074
    %s1167 = smul.f32 %s1126, %s1164
    %s1168 = smul.f32 %s1131, %s1165
    %s1169 = sadd.f32 %s1167, %s1168
    %s1170 = smul.f32 %s1136, %s1166
    %s1171 = sadd.f32 %s1169, %s1170
    %s1172 = smul.f32 %s1171, %s1121
    %s1173 = sadd.f32 %s1068, %s1172
    %s1174 = smul.f32 %s1141, %s1164
    %s1175 = smul.f32 %s1145, %s1165
    %s1176 = sadd.f32 %s1174, %s1175
    %s1177 = smul.f32 %s1150, %s1166
    %s1178 = sadd.f32 %s1176, %s1177
    %s1179 = smul.f32 %s1178, %s1121
    %s1180 = sadd.f32 %s1071, %s1179
    %s1181 = smul.f32 %s1155, %s1164
    %s1182 = smul.f32 %s1160, %s1165
    %s1183 = sadd.f32 %s1181, %s1182
    %s1184 = smul.f32 %s1163, %s1166
    %s1185 = sadd.f32 %s1183, %s1184
    %s1186 = smul.f32 %s1185, %s1121
    %s1187 = sadd.f32 %s1074, %s1186
    %s1188 = scalar_lea.smem [#allocation5], 21
    %1189 = sst [smem:[%s1188]] %s1173
    %s1190 = scalar_lea.smem [#allocation5], 22
    %1191 = sst [smem:[%s1190]] %s1180
    %s1192 = scalar_lea.smem [#allocation5], 23
    %1193 = sst [smem:[%s1192]] %s1187
    // Predicated region
    $region10: #{tpu_custom_call.1} parent=1 // pred_check
      _
    $region11: #{tpu_custom_call.1} parent=1 // pred_check_branch
      %1195 = sbr.rel (0) target = $region13
    $region12: #{tpu_custom_call.1} parent=1 // pred_region
      %s1197 = ssub.s32 16, 16
      %1198 = vsyncadd [#allocation4], %s1197
      %1201 = dma.smem_to_hbm [#allocation5], 16, %s1, [#allocation4]
    $region13: #{tpu_custom_call.1} parent=1 // pred_fallthru
      _
    // Predicated region
    $region14: #{tpu_custom_call.1} parent=1 // pred_check
      _
    $region15: #{tpu_custom_call.1} parent=1 // pred_check_branch
      %1203 = sbr.rel (0) target = $region17
    $region16: #{tpu_custom_call.1} parent=1 // pred_region
      %1204 = dma.done [#allocation4], 16
    $region17: #{tpu_custom_call.1} parent=1 // pred_fallthru
      _
    %1205 = sfence
    %1206 = vsyncpa [#allocation3], 1
    %1207 = vsyncpa [#allocation4], 1

</llo_original>
